<compile_context>
chip_gen: v5e
topology: v5e:2x2
jax: 0.10.0
libtpu: 0.0.40
codegen_flags: <defaults>
</compile_context>

<pallas_src>
import math
from functools import partial

import jax
import jax.numpy as jnp
from jax import lax
from jax.experimental import pallas as pl
from jax.experimental.pallas import tpu as pltpu


NEG_INF = -1e30                      # large finite value: avoids inf-inf NaNs
_VMEM_BUDGET = 40 * 1024 * 1024      # per-kernel working-set target (v7x-safe)


def _round_up(x, m):
    return (x + m - 1) // m * m


def _vmem_limit(est_bytes):
    """Scoped-VMEM limit: >= default 32 MiB, capped at 48 MiB (v7x-safe)."""
    return int(min(max(32 * 1024 * 1024, est_bytes * 3 // 2), 48 * 1024 * 1024))


def _choose_tile(dim, max_tile, align):
    """Return (tile, padded_dim) with tile | padded_dim.

    `align` is 8 for second-minor block dims and 128 for minor (lane) dims.
    Small dims use a full-extent block (always legal); large non-divisible dims
    are zero-padded to a multiple of `max_tile` (sliced off by the caller)
    instead of falling back to tiny tiles or a full-extent blow-up.
    """
    if dim <= max_tile:
        return dim, dim
    for t in range(max_tile, align - 1, -align):
        if dim % t == 0 and t >= min(128, max_tile):
            return t, dim
    padded = _round_up(dim, max_tile)
    return max_tile, padded


# ----------------------------- tiled linear ---------------------------------

def _linear_kernel(x_ref, w_ref, b_ref, o_ref, acc_ref):
    # x: (tm, tk)  w: (tn, tk)  b: (1, tn)  o: (tm, tn)  acc: (tm, tn) f32
    kk = pl.program_id(2)

    @pl.when(kk == 0)
    def _init():
        acc_ref[...] = jnp.zeros_like(acc_ref)

    # nn.Linear: y = x @ W.T  — contract the LAST dims of both tiles, so no
    # transposed weight tile is ever materialized.  Operands keep the input
    # dtype (bf16 inputs -> bf16-native MXU), accumulation is f32.
    acc_ref[...] += lax.dot_general(
        x_ref[...], w_ref[...],
        dimension_numbers=(((1,), (1,)), ((), ())),
        preferred_element_type=jnp.float32)

    @pl.when(kk == pl.num_programs(2) - 1)
    def _fin():
        o_ref[...] = (acc_ref[...] + b_ref[...].astype(jnp.float32)).astype(o_ref.dtype)


def pallas_linear(x, w, b):
    """x: (N, Din), w: (Dout, Din), b: (Dout,) -> x @ w.T + b : (N, Dout)."""
    N, Din = x.shape
    Dout = w.shape[0]
    out_dtype = x.dtype
    esize = x.dtype.itemsize

    tm, n_pad = _choose_tile(N, 512, 8)        # rows (second-minor)
    tn, dout_pad = _choose_tile(Dout, 512, 128)  # output cols (lane dim of out)
    tkc, din_pad = _choose_tile(Din, 512, 128)   # contraction (lane dim of x/w)

    if n_pad != N:
        x = jnp.pad(x, ((0, n_pad - N), (0, 0)))
    if din_pad != Din:
        x = jnp.pad(x, ((0, 0), (0, din_pad - Din)))
        w = jnp.pad(w, ((0, 0), (0, din_pad - Din)))
    if dout_pad != Dout:
        w = jnp.pad(w, ((0, dout_pad - Dout), (0, 0)))
        b = jnp.pad(b, ((0, dout_pad - Dout),))
    b2 = b.reshape(1, dout_pad)

    grid = (n_pad // tm, dout_pad // tn, din_pad // tkc)
    est = (2 * (tm * tkc + tn * tkc + tn) + 2 * tm * tn) * esize + tm * tn * 4
    cost = pl.CostEstimate(
        flops=2 * N * Dout * Din,
        transcendentals=0,
        bytes_accessed=esize * (N * Din * (dout_pad // tn)
                                + Dout * Din * (n_pad // tm)
                                + N * Dout + Dout))

    out = pl.pallas_call(
        _linear_kernel,
        grid=grid,
        in_specs=[
            pl.BlockSpec((tm, tkc), lambda i, j, kk: (i, kk)),
            pl.BlockSpec((tn, tkc), lambda i, j, kk: (j, kk)),
            pl.BlockSpec((1, tn), lambda i, j, kk: (0, j)),
        ],
        out_specs=pl.BlockSpec((tm, tn), lambda i, j, kk: (i, j)),
        out_shape=jax.ShapeDtypeStruct((n_pad, dout_pad), out_dtype),
        scratch_shapes=[pltpu.VMEM((tm, tn), jnp.float32)],
        compiler_params=pltpu.CompilerParams(
            dimension_semantics=("parallel", "parallel", "arbitrary"),
            vmem_limit_bytes=_vmem_limit(est)),
        cost_estimate=cost,
    )(x, w, b2)

    if n_pad != N or dout_pad != Dout:
        out = out[:N, :Dout]
    return out


# --------------------------- flash attention ---------------------------------

def _flash_attn_kernel(q_ref, k_ref, v_ref, o_ref, m_ref, l_ref, acc_ref, *,
                       num_heads, head_dim, kv_tile, seq_len, masked):
    # q: (1, tq, D)   k/v: (1, tk, D)   o: (1, tq, D)
    # m/l: (tq, H) f32 running max / denominator (one column per head)
    # acc: (H, tq, hd) f32 output accumulator (full-slab updates, no interior
    #      lane-masked read-modify-write in the hot loop)
    hd = head_dim
    kv_i = pl.program_id(2)

    @pl.when(kv_i == 0)
    def _init():
        m_ref[...] = jnp.full_like(m_ref, NEG_INF)
        l_ref[...] = jnp.zeros_like(l_ref)
        acc_ref[...] = jnp.zeros_like(acc_ref)

    if masked:
        # Key-padding mask for the zero-padded tail of the sequence.
        col = kv_i * kv_tile + lax.broadcasted_iota(jnp.int32, (1, kv_tile), 1)
        kmask = col < seq_len                                       # (1, tk)

    # TODO(synk): the optional `mask` argument of the PyTorch forward is not
    # wired in (mask=None path only).
    # NOTE: for very large num_heads this unrolled loop should become a
    # fori_loop / head grid axis to bound vreg live ranges.
    for h in range(num_heads):
        sl = slice(h * hd, (h + 1) * hd)
        qh = q_ref[0, :, sl]                 # (tq, hd), scale already folded in
        kh = k_ref[0, :, sl]                 # (tk, hd)
        vh = v_ref[0, :, sl]                 # (tk, hd)

        s = lax.dot_general(qh, kh,
                            dimension_numbers=(((1,), (1,)), ((), ())),
                            preferred_element_type=jnp.float32)     # (tq, tk)
        if masked:
            s = jnp.where(kmask, s, NEG_INF)

        m_prev = m_ref[:, h:h + 1]                                  # (tq, 1)
        m_new = jnp.maximum(m_prev, jnp.max(s, axis=-1, keepdims=True))
        alpha = jnp.exp(m_prev - m_new)                             # (tq, 1) compact
        p = jnp.exp(s - m_new)                                      # (tq, tk)

        l_ref[:, h:h + 1] = alpha * l_ref[:, h:h + 1] + jnp.sum(p, axis=-1,
                                                                keepdims=True)
        acc_ref[h] = alpha * acc_ref[h] + jnp.dot(
            p.astype(vh.dtype), vh, preferred_element_type=jnp.float32)
        m_ref[:, h:h + 1] = m_new

    @pl.when(kv_i == pl.num_programs(2) - 1)
    def _fin():
        # Exact division on the compact (tq, H) denominator — epilogue only,
        # so the cost is negligible and no tolerance loosening is needed.
        inv_l = 1.0 / l_ref[...]
        out = jnp.concatenate(
            [acc_ref[h] * inv_l[:, h:h + 1] for h in range(num_heads)], axis=-1)
        o_ref[0] = out.astype(o_ref.dtype)          # one lane-dense (tq, D) store


def _attn_vmem_bytes(tq, tk, d_model, esize, num_heads):
    hd = d_model // num_heads
    dbuf = 2 * (2 * tq * d_model + 2 * tk * d_model) * esize   # q, out, k, v (x2 buf)
    scratch = (2 * tq * num_heads + num_heads * tq * hd) * 4
    temps = 2 * tq * tk * 4
    return dbuf + scratch + temps


def _attn_tiles(S, d_model, num_heads, esize):
    """VMEM-budget-aware (tq, tk, padded_S) selection."""
    tq = tk = s_pad = S
    for max_tq, max_tk in ((512, 256), (256, 256), (256, 128), (128, 128)):
        tq, s_pad = _choose_tile(S, max_tq, 8)
        tk, s_pad2 = _choose_tile(s_pad, max_tk, 8)
        if s_pad2 != s_pad:
            s_pad = s_pad2
            tq, _ = _choose_tile(s_pad, max_tq, 8)
        if _attn_vmem_bytes(tq, tk, d_model, esize, num_heads) <= _VMEM_BUDGET:
            break
    return tq, tk, s_pad


def pallas_flash_attention(qp, kp, vp, *, d_model, num_heads, seq_len, tq, tk,
                           col_blocks=(0, 0, 0)):
    """qp/kp/vp: (B, S_pad, *) already-projected; heads are column slices of D.

    `col_blocks` selects which D-wide column block of each input holds the
    Q/K/V activations (used by the fused self-attention path where all three
    point at the same (B, S_pad, 3D) array).
    """
    B, s_pad, _ = qp.shape
    hd = d_model // num_heads
    esize = qp.dtype.itemsize
    masked = (s_pad != seq_len)
    grid = (B, s_pad // tq, s_pad // tk)
    qb, kb, vb = col_blocks

    def make_q_map(c):
        return lambda b, qi, ki: (b, qi, c)

    def make_kv_map(c):
        return lambda b, qi, ki: (b, ki, c)

    kernel = partial(_flash_attn_kernel, num_heads=num_heads, head_dim=hd,
                     kv_tile=tk, seq_len=seq_len, masked=masked)
    est = _attn_vmem_bytes(tq, tk, d_model, esize, num_heads)
    cost = pl.CostEstimate(
        flops=4 * B * s_pad * s_pad * d_model,
        transcendentals=B * num_heads * s_pad * s_pad,
        # Q and O read/written once; K and V re-streamed once per Q block.
        bytes_accessed=esize * B * s_pad * d_model * (2 + 2 * (s_pad // tq)))

    return pl.pallas_call(
        kernel,
        grid=grid,
        in_specs=[
            pl.BlockSpec((1, tq, d_model), make_q_map(qb)),
            pl.BlockSpec((1, tk, d_model), make_kv_map(kb)),
            pl.BlockSpec((1, tk, d_model), make_kv_map(vb)),
        ],
        out_specs=pl.BlockSpec((1, tq, d_model), lambda b, qi, ki: (b, qi, 0)),
        out_shape=jax.ShapeDtypeStruct((B, s_pad, d_model), qp.dtype),
        scratch_shapes=[
            pltpu.VMEM((tq, num_heads), jnp.float32),          # running max
            pltpu.VMEM((tq, num_heads), jnp.float32),          # denominator
            pltpu.VMEM((num_heads, tq, hd), jnp.float32),      # output accumulator
        ],
        compiler_params=pltpu.CompilerParams(
            dimension_semantics=("parallel", "parallel", "arbitrary"),
            vmem_limit_bytes=_vmem_limit(est)),
        cost_estimate=cost,
    )(qp, kp, vp)


# ------------------------------- forward -------------------------------------

def multi_head_attention(q, k, v, params, num_heads):
    """Forward pass equivalent to the PyTorch MultiHeadAttention (mask=None)."""
    B, S, D = q.shape
    assert D % num_heads == 0
    hd = D // num_heads
    scale = 1.0 / math.sqrt(hd)
    self_attn = (q is k) and (k is v)

    # Decide attention tiling / sequence padding up-front so padding is done once.
    tq, tk, s_pad = _attn_tiles(S, D, num_heads, q.dtype.itemsize)
    if s_pad != S:
        pad = ((0, 0), (0, s_pad - S), (0, 0))
        q = jnp.pad(q, pad)
        k = q if self_attn else jnp.pad(k, pad)
        v = q if self_attn else jnp.pad(v, pad)
    N = B * s_pad

    # Fold the 1/sqrt(head_dim) softmax scale into the Q projection (free).
    wq = params["wq"] * scale
    bq = params["bq"] * scale

    if self_attn and D % 128 == 0:
        # Self-attention: one fused projection reads the activations once and
        # the attention kernel consumes Q/K/V as column blocks of the fused
        # (B, S, 3D) output — no slicing copies in HBM.
        # (In a real module the weight concat is done once at init time.)
        w_qkv = jnp.concatenate([wq, params["wk"], params["wv"]], axis=0)
        b_qkv = jnp.concatenate([bq, params["bk"], params["bv"]], axis=0)
        qkv = pallas_linear(q.reshape(N, D), w_qkv, b_qkv).reshape(B, s_pad, 3 * D)
        attn = pallas_flash_attention(
            qkv, qkv, qkv, d_model=D, num_heads=num_heads, seq_len=S,
            tq=tq, tk=tk, col_blocks=(0, 1, 2))
    else:
        # General (cross-attention) path: each activation is read exactly once,
        # no stacked copy of the activations is ever materialized.
        Qp = pallas_linear(q.reshape(N, D), wq, bq).reshape(B, s_pad, D)
        Kp = pallas_linear(k.reshape(N, D), params["wk"], params["bk"]).reshape(B, s_pad, D)
        Vp = pallas_linear(v.reshape(N, D), params["wv"], params["bv"]).reshape(B, s_pad, D)
        attn = pallas_flash_attention(
            Qp, Kp, Vp, d_model=D, num_heads=num_heads, seq_len=S, tq=tq, tk=tk)

    out = pallas_linear(attn.reshape(N, D), params["wo"], params["bo"])
    out = out.reshape(B, s_pad, D)
    return out[:, :S, :] if s_pad != S else out


# --------------------------- reference (pure JAX) ----------------------------

def reference_mha(q, k, v, params, num_heads):
    B, S, D = q.shape
    H = num_heads
    hd = D // H

    def lin(x, w, b):
        return x @ w.T + b

    def split(x):
        return x.reshape(B, S, H, hd).transpose(0, 2, 1, 3)

    Qh = split(lin(q, params["wq"], params["bq"]))
    Kh = split(lin(k, params["wk"], params["bk"]))
    Vh = split(lin(v, params["wv"], params["bv"]))

    scores = jnp.einsum("bhqd,bhkd->bhqk", Qh, Kh) / math.sqrt(hd)
    probs = jax.nn.softmax(scores, axis=-1)
    out = jnp.einsum("bhqk,bhkd->bhqd", probs, Vh)
    out = out.transpose(0, 2, 1, 3).reshape(B, S, D)
    return lin(out, params["wo"], params["bo"])


# --------------------------------- main --------------------------------------

if __name__ == "__main__":
    B, S, D, H = 2, 8, 32, 4   # batch, seq_len, d_model, num_heads

    key = jax.random.PRNGKey(0)
    keys = jax.random.split(key, 11)

    bound = 1.0 / math.sqrt(D)

    def init_w(kk):
        return jax.random.uniform(kk, (D, D), jnp.float32, -bound, bound)

    def init_b(kk):
        return jax.random.uniform(kk, (D,), jnp.float32, -bound, bound)

    params = {
        "wq": init_w(keys[0]), "bq": init_b(keys[1]),
        "wk": init_w(keys[2]), "bk": init_b(keys[3]),
        "wv": init_w(keys[4]), "bv": init_b(keys[5]),
        "wo": init_w(keys[6]), "bo": init_b(keys[7]),
    }

    q = jax.random.normal(keys[8], (B, S, D), jnp.float32)
    k = jax.random.normal(keys[9], (B, S, D), jnp.float32)
    v = jax.random.normal(keys[10], (B, S, D), jnp.float32)

    mha = jax.jit(multi_head_attention, static_argnums=(4,))
    out = mha(q, k, v, params, H)
    out = jax.block_until_ready(out)

    ref = reference_mha(q, k, v, params, H)
    assert out.shape == (B, S, D)
    max_err = float(jnp.max(jnp.abs(out - ref)))
    # Softmax normalization uses exact division now; the remaining tolerance
    # only covers matmul precision / accumulation-order differences.
    assert jnp.allclose(out, ref, atol=5e-3, rtol=5e-3), (
        f"mismatch vs JAX reference (max abs err {max_err})")

    print("KERNEL_OK")
</pallas_src>

<mosaic_0001>
module attributes {stable_mosaic.version = 11 : i64} {
  func.func @_linear_kernel(%arg0: i32, %arg1: i32, %arg2: i32, %arg3: memref<16x32xf32, #tpu.memory_space<vmem>>, %arg4: memref<32x32xf32, #tpu.memory_space<vmem>>, %arg5: memref<1x32xf32, #tpu.memory_space<vmem>>, %arg6: memref<16x32xf32, #tpu.memory_space<vmem>>, %arg7: memref<16x32xf32, #tpu.memory_space<vmem>>) attributes {dimension_semantics = [#tpu.dimension_semantics<parallel>, #tpu.dimension_semantics<parallel>, #tpu.dimension_semantics<arbitrary>], iteration_bounds = array<i64: 1, 1, 1>, scalar_prefetch = 0 : i64, scratch_operands = 1 : i64, tpu.core_type = #tpu.core_type<tc>, window_params = [{transform_indices = @transform_0, window_bounds = array<i64: 16, 32>}, {transform_indices = @transform_1, window_bounds = array<i64: 32, 32>}, {transform_indices = @transform_2, window_bounds = array<i64: 1, 32>}, {transform_indices = @transform_3, window_bounds = array<i64: 16, 32>}]} {
    %c0_i32 = arith.constant 0 : i32
    %0 = arith.cmpi eq, %arg2, %c0_i32 : i32
    %1 = arith.extui %0 : i1 to i32
    %c0_i32_0 = arith.constant 0 : i32
    %2 = arith.cmpi ne, %1, %c0_i32_0 : i32
    scf.if %2 {
      %cst_10 = arith.constant 0.000000e+00 : f32
      %12 = vector.broadcast %cst_10 : f32 to vector<16x32xf32>
      %c0_11 = arith.constant 0 : index
      %c0_12 = arith.constant 0 : index
      %13 = vector.load %arg7[%c0_11, %c0_12] : memref<16x32xf32, #tpu.memory_space<vmem>>, vector<16x32xf32>
      tpu.vector_store %arg7[%c0_11, %c0_12], %12 {strides = array<i32>} : memref<16x32xf32, #tpu.memory_space<vmem>>, vector<16x32xf32>,
    } else {
    }
    %c0 = arith.constant 0 : index
    %c0_1 = arith.constant 0 : index
    %3 = vector.load %arg7[%c0, %c0_1] : memref<16x32xf32, #tpu.memory_space<vmem>>, vector<16x32xf32>
    %c0_2 = arith.constant 0 : index
    %c0_3 = arith.constant 0 : index
    %4 = vector.load %arg3[%c0_2, %c0_3] : memref<16x32xf32, #tpu.memory_space<vmem>>, vector<16x32xf32>
    %c0_4 = arith.constant 0 : index
    %c0_5 = arith.constant 0 : index
    %5 = vector.load %arg4[%c0_4, %c0_5] : memref<32x32xf32, #tpu.memory_space<vmem>>, vector<32x32xf32>
    %cst = arith.constant dense<0.000000e+00> : vector<16x32xf32>
    %6 = tpu.matmul %4, %5, %cst {dimension_numbers = #tpu.dot_dimension_numbers<[1], [1], [0], [0], [0, 0, 1, 0], [], []>} : vector<16x32xf32>, vector<32x32xf32>, vector<16x32xf32> -> vector<16x32xf32>
    %7 = arith.addf %3, %6 : vector<16x32xf32>
    %c0_6 = arith.constant 0 : index
    %c0_7 = arith.constant 0 : index
    %8 = vector.load %arg7[%c0_6, %c0_7] : memref<16x32xf32, #tpu.memory_space<vmem>>, vector<16x32xf32>
    tpu.vector_store %arg7[%c0_6, %c0_7], %7 {strides = array<i32>} : memref<16x32xf32, #tpu.memory_space<vmem>>, vector<16x32xf32>,
    %c0_i32_8 = arith.constant 0 : i32
    %9 = arith.cmpi eq, %arg2, %c0_i32_8 : i32
    %10 = arith.extui %9 : i1 to i32
    %c0_i32_9 = arith.constant 0 : i32
    %11 = arith.cmpi ne, %10, %c0_i32_9 : i32
    scf.if %11 {
      %c0_10 = arith.constant 0 : index
      %c0_11 = arith.constant 0 : index
      %12 = vector.load %arg7[%c0_10, %c0_11] : memref<16x32xf32, #tpu.memory_space<vmem>>, vector<16x32xf32>
      %c0_12 = arith.constant 0 : index
      %c0_13 = arith.constant 0 : index
      %13 = vector.load %arg5[%c0_12, %c0_13] : memref<1x32xf32, #tpu.memory_space<vmem>>, vector<1x32xf32>
      %14 = vector.broadcast %13 : vector<1x32xf32> to vector<16x32xf32>
      %15 = arith.addf %12, %14 : vector<16x32xf32>
      %c0_14 = arith.constant 0 : index
      %c0_15 = arith.constant 0 : index
      %16 = vector.load %arg6[%c0_14, %c0_15] : memref<16x32xf32, #tpu.memory_space<vmem>>, vector<16x32xf32>
      tpu.vector_store %arg6[%c0_14, %c0_15], %15 {strides = array<i32>} : memref<16x32xf32, #tpu.memory_space<vmem>>, vector<16x32xf32>,
    } else {
    }
    return
  }
  func.func @transform_0(%arg0: i32, %arg1: i32, %arg2: i32) -> (i32, i32) {
    %c0_i32 = arith.constant 0 : i32
    return %arg0, %arg2 : i32, i32
  }
  func.func @transform_1(%arg0: i32, %arg1: i32, %arg2: i32) -> (i32, i32) {
    %c0_i32 = arith.constant 0 : i32
    return %arg1, %arg2 : i32, i32
  }
  func.func @transform_2(%arg0: i32, %arg1: i32, %arg2: i32) -> (i32, i32) {
    %c0_i32 = arith.constant 0 : i32
    %c0_i32_0 = arith.constant 0 : i32
    return %c0_i32, %arg1 : i32, i32
  }
  func.func @transform_3(%arg0: i32, %arg1: i32, %arg2: i32) -> (i32, i32) {
    %c0_i32 = arith.constant 0 : i32
    return %arg0, %arg1 : i32, i32
  }
}

module attributes {stable_mosaic.version = 11 : i64} {
  func.func @_linear_kernel(%arg0: i32, %arg1: i32, %arg2: i32, %arg3: memref<16x32xf32, #tpu.memory_space<vmem>>, %arg4: memref<32x32xf32, #tpu.memory_space<vmem>>, %arg5: memref<1x32xf32, #tpu.memory_space<vmem>>, %arg6: memref<16x32xf32, #tpu.memory_space<vmem>>, %arg7: memref<16x32xf32, #tpu.memory_space<vmem>>) attributes {dimension_semantics = [#tpu.dimension_semantics<parallel>, #tpu.dimension_semantics<parallel>, #tpu.dimension_semantics<arbitrary>], iteration_bounds = array<i64: 1, 1, 1>, scalar_prefetch = 0 : i64, scratch_operands = 1 : i64, tpu.core_type = #tpu.core_type<tc>, window_params = [{transform_indices = @transform_0, window_bounds = array<i64: 16, 32>}, {transform_indices = @transform_1, window_bounds = array<i64: 32, 32>}, {transform_indices = @transform_2, window_bounds = array<i64: 1, 32>}, {transform_indices = @transform_3, window_bounds = array<i64: 16, 32>}]} {
    %c0_i32 = arith.constant 0 : i32
    %0 = arith.cmpi eq, %arg2, %c0_i32 : i32
    %1 = arith.extui %0 : i1 to i32
    %c0_i32_0 = arith.constant 0 : i32
    %2 = arith.cmpi ne, %1, %c0_i32_0 : i32
    scf.if %2 {
      %cst_10 = arith.constant 0.000000e+00 : f32
      %12 = vector.broadcast %cst_10 : f32 to vector<16x32xf32>
      %c0_11 = arith.constant 0 : index
      %c0_12 = arith.constant 0 : index
      %13 = vector.load %arg7[%c0_11, %c0_12] : memref<16x32xf32, #tpu.memory_space<vmem>>, vector<16x32xf32>
      tpu.vector_store %arg7[%c0_11, %c0_12], %12 {strides = array<i32>} : memref<16x32xf32, #tpu.memory_space<vmem>>, vector<16x32xf32>,
    } else {
    }
    %c0 = arith.constant 0 : index
    %c0_1 = arith.constant 0 : index
    %3 = vector.load %arg7[%c0, %c0_1] : memref<16x32xf32, #tpu.memory_space<vmem>>, vector<16x32xf32>
    %c0_2 = arith.constant 0 : index
    %c0_3 = arith.constant 0 : index
    %4 = vector.load %arg3[%c0_2, %c0_3] : memref<16x32xf32, #tpu.memory_space<vmem>>, vector<16x32xf32>
    %c0_4 = arith.constant 0 : index
    %c0_5 = arith.constant 0 : index
    %5 = vector.load %arg4[%c0_4, %c0_5] : memref<32x32xf32, #tpu.memory_space<vmem>>, vector<32x32xf32>
    %cst = arith.constant dense<0.000000e+00> : vector<16x32xf32>
    %6 = tpu.matmul %4, %5, %cst {dimension_numbers = #tpu.dot_dimension_numbers<[1], [1], [0], [0], [0, 0, 1, 0], [], []>} : vector<16x32xf32>, vector<32x32xf32>, vector<16x32xf32> -> vector<16x32xf32>
    %7 = arith.addf %3, %6 : vector<16x32xf32>
    %c0_6 = arith.constant 0 : index
    %c0_7 = arith.constant 0 : index
    %8 = vector.load %arg7[%c0_6, %c0_7] : memref<16x32xf32, #tpu.memory_space<vmem>>, vector<16x32xf32>
    tpu.vector_store %arg7[%c0_6, %c0_7], %7 {strides = array<i32>} : memref<16x32xf32, #tpu.memory_space<vmem>>, vector<16x32xf32>,
    %c0_i32_8 = arith.constant 0 : i32
    %9 = arith.cmpi eq, %arg2, %c0_i32_8 : i32
    %10 = arith.extui %9 : i1 to i32
    %c0_i32_9 = arith.constant 0 : i32
    %11 = arith.cmpi ne, %10, %c0_i32_9 : i32
    scf.if %11 {
      %c0_10 = arith.constant 0 : index
      %c0_11 = arith.constant 0 : index
      %12 = vector.load %arg7[%c0_10, %c0_11] : memref<16x32xf32, #tpu.memory_space<vmem>>, vector<16x32xf32>
      %c0_12 = arith.constant 0 : index
      %c0_13 = arith.constant 0 : index
      %13 = vector.load %arg5[%c0_12, %c0_13] : memref<1x32xf32, #tpu.memory_space<vmem>>, vector<1x32xf32>
      %14 = vector.broadcast %13 : vector<1x32xf32> to vector<16x32xf32>
      %15 = arith.addf %12, %14 : vector<16x32xf32>
      %c0_14 = arith.constant 0 : index
      %c0_15 = arith.constant 0 : index
      %16 = vector.load %arg6[%c0_14, %c0_15] : memref<16x32xf32, #tpu.memory_space<vmem>>, vector<16x32xf32>
      tpu.vector_store %arg6[%c0_14, %c0_15], %15 {strides = array<i32>} : memref<16x32xf32, #tpu.memory_space<vmem>>, vector<16x32xf32>,
    } else {
    }
    return
  }
  func.func @transform_0(%arg0: i32, %arg1: i32, %arg2: i32) -> (i32, i32) {
    %c0_i32 = arith.constant 0 : i32
    return %arg0, %arg2 : i32, i32
  }
  func.func @transform_1(%arg0: i32, %arg1: i32, %arg2: i32) -> (i32, i32) {
    %c0_i32 = arith.constant 0 : i32
    return %arg1, %arg2 : i32, i32
  }
  func.func @transform_2(%arg0: i32, %arg1: i32, %arg2: i32) -> (i32, i32) {
    %c0_i32 = arith.constant 0 : i32
    %c0_i32_0 = arith.constant 0 : i32
    return %c0_i32, %arg1 : i32, i32
  }
  func.func @transform_3(%arg0: i32, %arg1: i32, %arg2: i32) -> (i32, i32) {
    %c0_i32 = arith.constant 0 : i32
    return %arg0, %arg1 : i32, i32
  }
}

module attributes {stable_mosaic.version = 11 : i64} {
  func.func @_linear_kernel(%arg0: i32, %arg1: i32, %arg2: i32, %arg3: memref<16x32xf32, #tpu.memory_space<vmem>>, %arg4: memref<32x32xf32, #tpu.memory_space<vmem>>, %arg5: memref<1x32xf32, #tpu.memory_space<vmem>>, %arg6: memref<16x32xf32, #tpu.memory_space<vmem>>, %arg7: memref<16x32xf32, #tpu.memory_space<vmem>>) attributes {dimension_semantics = [#tpu.dimension_semantics<parallel>, #tpu.dimension_semantics<parallel>, #tpu.dimension_semantics<arbitrary>], iteration_bounds = array<i64: 1, 1, 1>, scalar_prefetch = 0 : i64, scratch_operands = 1 : i64, tpu.core_type = #tpu.core_type<tc>, window_params = [{transform_indices = @transform_0, window_bounds = array<i64: 16, 32>}, {transform_indices = @transform_1, window_bounds = array<i64: 32, 32>}, {transform_indices = @transform_2, window_bounds = array<i64: 1, 32>}, {transform_indices = @transform_3, window_bounds = array<i64: 16, 32>}]} {
    %c0_i32 = arith.constant 0 : i32
    %0 = arith.cmpi eq, %arg2, %c0_i32 : i32
    %1 = arith.extui %0 : i1 to i32
    %c0_i32_0 = arith.constant 0 : i32
    %2 = arith.cmpi ne, %1, %c0_i32_0 : i32
    scf.if %2 {
      %cst_10 = arith.constant 0.000000e+00 : f32
      %12 = vector.broadcast %cst_10 : f32 to vector<16x32xf32>
      %c0_11 = arith.constant 0 : index
      %c0_12 = arith.constant 0 : index
      %13 = vector.load %arg7[%c0_11, %c0_12] : memref<16x32xf32, #tpu.memory_space<vmem>>, vector<16x32xf32>
      tpu.vector_store %arg7[%c0_11, %c0_12], %12 {strides = array<i32>} : memref<16x32xf32, #tpu.memory_space<vmem>>, vector<16x32xf32>,
    } else {
    }
    %c0 = arith.constant 0 : index
    %c0_1 = arith.constant 0 : index
    %3 = vector.load %arg7[%c0, %c0_1] : memref<16x32xf32, #tpu.memory_space<vmem>>, vector<16x32xf32>
    %c0_2 = arith.constant 0 : index
    %c0_3 = arith.constant 0 : index
    %4 = vector.load %arg3[%c0_2, %c0_3] : memref<16x32xf32, #tpu.memory_space<vmem>>, vector<16x32xf32>
    %c0_4 = arith.constant 0 : index
    %c0_5 = arith.constant 0 : index
    %5 = vector.load %arg4[%c0_4, %c0_5] : memref<32x32xf32, #tpu.memory_space<vmem>>, vector<32x32xf32>
    %cst = arith.constant dense<0.000000e+00> : vector<16x32xf32>
    %6 = tpu.matmul %4, %5, %cst {dimension_numbers = #tpu.dot_dimension_numbers<[1], [1], [0], [0], [0, 0, 1, 0], [], []>} : vector<16x32xf32>, vector<32x32xf32>, vector<16x32xf32> -> vector<16x32xf32>
    %7 = arith.addf %3, %6 : vector<16x32xf32>
    %c0_6 = arith.constant 0 : index
    %c0_7 = arith.constant 0 : index
    %8 = vector.load %arg7[%c0_6, %c0_7] : memref<16x32xf32, #tpu.memory_space<vmem>>, vector<16x32xf32>
    tpu.vector_store %arg7[%c0_6, %c0_7], %7 {strides = array<i32>} : memref<16x32xf32, #tpu.memory_space<vmem>>, vector<16x32xf32>,
    %c0_i32_8 = arith.constant 0 : i32
    %9 = arith.cmpi eq, %arg2, %c0_i32_8 : i32
    %10 = arith.extui %9 : i1 to i32
    %c0_i32_9 = arith.constant 0 : i32
    %11 = arith.cmpi ne, %10, %c0_i32_9 : i32
    scf.if %11 {
      %c0_10 = arith.constant 0 : index
      %c0_11 = arith.constant 0 : index
      %12 = vector.load %arg7[%c0_10, %c0_11] : memref<16x32xf32, #tpu.memory_space<vmem>>, vector<16x32xf32>
      %c0_12 = arith.constant 0 : index
      %c0_13 = arith.constant 0 : index
      %13 = vector.load %arg5[%c0_12, %c0_13] : memref<1x32xf32, #tpu.memory_space<vmem>>, vector<1x32xf32>
      %14 = vector.broadcast %13 : vector<1x32xf32> to vector<16x32xf32>
      %15 = arith.addf %12, %14 : vector<16x32xf32>
      %c0_14 = arith.constant 0 : index
      %c0_15 = arith.constant 0 : index
      %16 = vector.load %arg6[%c0_14, %c0_15] : memref<16x32xf32, #tpu.memory_space<vmem>>, vector<16x32xf32>
      tpu.vector_store %arg6[%c0_14, %c0_15], %15 {strides = array<i32>} : memref<16x32xf32, #tpu.memory_space<vmem>>, vector<16x32xf32>,
    } else {
    }
    return
  }
  func.func @transform_0(%arg0: i32, %arg1: i32, %arg2: i32) -> (i32, i32) {
    %c0_i32 = arith.constant 0 : i32
    return %arg0, %arg2 : i32, i32
  }
  func.func @transform_1(%arg0: i32, %arg1: i32, %arg2: i32) -> (i32, i32) {
    %c0_i32 = arith.constant 0 : i32
    return %arg1, %arg2 : i32, i32
  }
  func.func @transform_2(%arg0: i32, %arg1: i32, %arg2: i32) -> (i32, i32) {
    %c0_i32 = arith.constant 0 : i32
    %c0_i32_0 = arith.constant 0 : i32
    return %c0_i32, %arg1 : i32, i32
  }
  func.func @transform_3(%arg0: i32, %arg1: i32, %arg2: i32) -> (i32, i32) {
    %c0_i32 = arith.constant 0 : i32
    return %arg0, %arg1 : i32, i32
  }
}

module attributes {stable_mosaic.version = 11 : i64} {
  func.func @_flash_attn_kernel(%arg0: i32, %arg1: i32, %arg2: i32, %arg3: memref<1x8x32xf32, #tpu.memory_space<vmem>>, %arg4: memref<1x8x32xf32, #tpu.memory_space<vmem>>, %arg5: memref<1x8x32xf32, #tpu.memory_space<vmem>>, %arg6: memref<1x8x32xf32, #tpu.memory_space<vmem>>, %arg7: memref<8x4xf32, #tpu.memory_space<vmem>>, %arg8: memref<8x4xf32, #tpu.memory_space<vmem>>, %arg9: memref<4x8x8xf32, #tpu.memory_space<vmem>>) attributes {dimension_semantics = [#tpu.dimension_semantics<parallel>, #tpu.dimension_semantics<parallel>, #tpu.dimension_semantics<arbitrary>], iteration_bounds = array<i64: 2, 1, 1>, scalar_prefetch = 0 : i64, scratch_operands = 3 : i64, tpu.core_type = #tpu.core_type<tc>, window_params = [{transform_indices = @transform_0, window_bounds = array<i64: 1, 8, 32>}, {transform_indices = @transform_1, window_bounds = array<i64: 1, 8, 32>}, {transform_indices = @transform_2, window_bounds = array<i64: 1, 8, 32>}, {transform_indices = @transform_3, window_bounds = array<i64: 1, 8, 32>}]} {
    %c0_i32 = arith.constant 0 : i32
    %0 = arith.cmpi eq, %arg2, %c0_i32 : i32
    %1 = arith.extui %0 : i1 to i32
    %c0_i32_0 = arith.constant 0 : i32
    %2 = arith.cmpi ne, %1, %c0_i32_0 : i32
    scf.if %2 {
      %cst_103 = arith.constant -1.000000e+30 : f32
      %134 = vector.broadcast %cst_103 : f32 to vector<8x4xf32>
      %c0_104 = arith.constant 0 : index
      %c0_105 = arith.constant 0 : index
      %135 = vector.load %arg7[%c0_104, %c0_105] : memref<8x4xf32, #tpu.memory_space<vmem>>, vector<8x4xf32>
      tpu.vector_store %arg7[%c0_104, %c0_105], %134 {strides = array<i32>} : memref<8x4xf32, #tpu.memory_space<vmem>>, vector<8x4xf32>,
      %cst_106 = arith.constant 0.000000e+00 : f32
      %136 = vector.broadcast %cst_106 : f32 to vector<8x4xf32>
      %c0_107 = arith.constant 0 : index
      %c0_108 = arith.constant 0 : index
      %137 = vector.load %arg8[%c0_107, %c0_108] : memref<8x4xf32, #tpu.memory_space<vmem>>, vector<8x4xf32>
      tpu.vector_store %arg8[%c0_107, %c0_108], %136 {strides = array<i32>} : memref<8x4xf32, #tpu.memory_space<vmem>>, vector<8x4xf32>,
      %cst_109 = arith.constant 0.000000e+00 : f32
      %138 = vector.broadcast %cst_109 : f32 to vector<4x8x8xf32>
      %c0_110 = arith.constant 0 : index
      %c0_111 = arith.constant 0 : index
      %c0_112 = arith.constant 0 : index
      %139 = vector.load %arg9[%c0_110, %c0_111, %c0_112] : memref<4x8x8xf32, #tpu.memory_space<vmem>>, vector<4x8x8xf32>
      tpu.vector_store %arg9[%c0_110, %c0_111, %c0_112], %138 {strides = array<i32>} : memref<4x8x8xf32, #tpu.memory_space<vmem>>, vector<4x8x8xf32>,
    } else {
    }
    %c0 = arith.constant 0 : index
    %c0_1 = arith.constant 0 : index
    %c0_2 = arith.constant 0 : index
    %3 = vector.load %arg3[%c0, %c0_1, %c0_2] : memref<1x8x32xf32, #tpu.memory_space<vmem>>, vector<1x8x8xf32>
    %4 = vector.shape_cast %3 : vector<1x8x8xf32> to vector<8x8xf32>
    %c0_3 = arith.constant 0 : index
    %c0_4 = arith.constant 0 : index
    %c0_5 = arith.constant 0 : index
    %5 = vector.load %arg4[%c0_3, %c0_4, %c0_5] : memref<1x8x32xf32, #tpu.memory_space<vmem>>, vector<1x8x8xf32>
    %6 = vector.shape_cast %5 : vector<1x8x8xf32> to vector<8x8xf32>
    %c0_6 = arith.constant 0 : index
    %c0_7 = arith.constant 0 : index
    %c0_8 = arith.constant 0 : index
    %7 = vector.load %arg5[%c0_6, %c0_7, %c0_8] : memref<1x8x32xf32, #tpu.memory_space<vmem>>, vector<1x8x8xf32>
    %8 = vector.shape_cast %7 : vector<1x8x8xf32> to vector<8x8xf32>
    %cst = arith.constant dense<0.000000e+00> : vector<8x8xf32>
    %9 = tpu.matmul %4, %6, %cst {dimension_numbers = #tpu.dot_dimension_numbers<[1], [1], [0], [0], [0, 0, 1, 0], [], []>} : vector<8x8xf32>, vector<8x8xf32>, vector<8x8xf32> -> vector<8x8xf32>
    %c0_9 = arith.constant 0 : index
    %c0_10 = arith.constant 0 : index
    %10 = vector.load %arg7[%c0_9, %c0_10] : memref<8x4xf32, #tpu.memory_space<vmem>>, vector<8x1xf32>
    %cst_11 = arith.constant dense<0xFF800000> : vector<8xf32>
    %11 = vector.multi_reduction <maximumf>, %9, %cst_11 [1] : vector<8x8xf32> to vector<8xf32>
    %12 = vector.shape_cast %11 : vector<8xf32> to vector<8x1xf32>
    %13 = arith.maximumf %10, %12 : vector<8x1xf32>
    %14 = arith.subf %10, %13 : vector<8x1xf32>
    %15 = math.exp %14 : vector<8x1xf32>
    %16 = vector.broadcast %13 : vector<8x1xf32> to vector<8x8xf32>
    %17 = arith.subf %9, %16 : vector<8x8xf32>
    %18 = math.exp %17 : vector<8x8xf32>
    %c0_12 = arith.constant 0 : index
    %c0_13 = arith.constant 0 : index
    %19 = vector.load %arg8[%c0_12, %c0_13] : memref<8x4xf32, #tpu.memory_space<vmem>>, vector<8x1xf32>
    %20 = arith.mulf %15, %19 : vector<8x1xf32>
    %cst_14 = arith.constant dense<0.000000e+00> : vector<8xf32>
    %21 = vector.multi_reduction <add>, %18, %cst_14 [1] : vector<8x8xf32> to vector<8xf32>
    %22 = vector.shape_cast %21 : vector<8xf32> to vector<8x1xf32>
    %23 = arith.addf %20, %22 : vector<8x1xf32>
    %c0_15 = arith.constant 0 : index
    %c0_16 = arith.constant 0 : index
    %24 = vector.load %arg8[%c0_15, %c0_16] : memref<8x4xf32, #tpu.memory_space<vmem>>, vector<8x1xf32>
    tpu.vector_store %arg8[%c0_15, %c0_16], %23 {strides = array<i32>} : memref<8x4xf32, #tpu.memory_space<vmem>>, vector<8x1xf32>,
    %c0_17 = arith.constant 0 : index
    %c0_18 = arith.constant 0 : index
    %c0_19 = arith.constant 0 : index
    %25 = vector.load %arg9[%c0_17, %c0_18, %c0_19] : memref<4x8x8xf32, #tpu.memory_space<vmem>>, vector<1x8x8xf32>
    %26 = vector.shape_cast %25 : vector<1x8x8xf32> to vector<8x8xf32>
    %27 = vector.broadcast %15 : vector<8x1xf32> to vector<8x8xf32>
    %28 = arith.mulf %27, %26 : vector<8x8xf32>
    %cst_20 = arith.constant dense<0.000000e+00> : vector<8x8xf32>
    %29 = tpu.matmul %18, %8, %cst_20 {dimension_numbers = #tpu.dot_dimension_numbers<[1], [0], [0], [1], [0, 0, 1, 1], [], []>} : vector<8x8xf32>, vector<8x8xf32>, vector<8x8xf32> -> vector<8x8xf32>
    %30 = arith.addf %28, %29 : vector<8x8xf32>
    %c0_21 = arith.constant 0 : index
    %c0_22 = arith.constant 0 : index
    %c0_23 = arith.constant 0 : index
    %31 = vector.load %arg9[%c0_21, %c0_22, %c0_23] : memref<4x8x8xf32, #tpu.memory_space<vmem>>, vector<1x8x8xf32>
    %32 = vector.shape_cast %31 : vector<1x8x8xf32> to vector<8x8xf32>
    %33 = vector.shape_cast %30 : vector<8x8xf32> to vector<1x8x8xf32>
    tpu.vector_store %arg9[%c0_21, %c0_22, %c0_23], %33 {strides = array<i32>} : memref<4x8x8xf32, #tpu.memory_space<vmem>>, vector<1x8x8xf32>,
    %c0_24 = arith.constant 0 : index
    %c0_25 = arith.constant 0 : index
    %34 = vector.load %arg7[%c0_24, %c0_25] : memref<8x4xf32, #tpu.memory_space<vmem>>, vector<8x1xf32>
    tpu.vector_store %arg7[%c0_24, %c0_25], %13 {strides = array<i32>} : memref<8x4xf32, #tpu.memory_space<vmem>>, vector<8x1xf32>,
    %c0_26 = arith.constant 0 : index
    %c0_27 = arith.constant 0 : index
    %c8 = arith.constant 8 : index
    %35 = vector.load %arg3[%c0_26, %c0_27, %c8] : memref<1x8x32xf32, #tpu.memory_space<vmem>>, vector<1x8x8xf32>
    %36 = vector.shape_cast %35 : vector<1x8x8xf32> to vector<8x8xf32>
    %c0_28 = arith.constant 0 : index
    %c0_29 = arith.constant 0 : index
    %c8_30 = arith.constant 8 : index
    %37 = vector.load %arg4[%c0_28, %c0_29, %c8_30] : memref<1x8x32xf32, #tpu.memory_space<vmem>>, vector<1x8x8xf32>
    %38 = vector.shape_cast %37 : vector<1x8x8xf32> to vector<8x8xf32>
    %c0_31 = arith.constant 0 : index
    %c0_32 = arith.constant 0 : index
    %c8_33 = arith.constant 8 : index
    %39 = vector.load %arg5[%c0_31, %c0_32, %c8_33] : memref<1x8x32xf32, #tpu.memory_space<vmem>>, vector<1x8x8xf32>
    %40 = vector.shape_cast %39 : vector<1x8x8xf32> to vector<8x8xf32>
    %cst_34 = arith.constant dense<0.000000e+00> : vector<8x8xf32>
    %41 = tpu.matmul %36, %38, %cst_34 {dimension_numbers = #tpu.dot_dimension_numbers<[1], [1], [0], [0], [0, 0, 1, 0], [], []>} : vector<8x8xf32>, vector<8x8xf32>, vector<8x8xf32> -> vector<8x8xf32>
    %c0_35 = arith.constant 0 : index
    %c1 = arith.constant 1 : index
    %42 = vector.load %arg7[%c0_35, %c1] : memref<8x4xf32, #tpu.memory_space<vmem>>, vector<8x1xf32>
    %cst_36 = arith.constant dense<0xFF800000> : vector<8xf32>
    %43 = vector.multi_reduction <maximumf>, %41, %cst_36 [1] : vector<8x8xf32> to vector<8xf32>
    %44 = vector.shape_cast %43 : vector<8xf32> to vector<8x1xf32>
    %45 = arith.maximumf %42, %44 : vector<8x1xf32>
    %46 = arith.subf %42, %45 : vector<8x1xf32>
    %47 = math.exp %46 : vector<8x1xf32>
    %48 = vector.broadcast %45 : vector<8x1xf32> to vector<8x8xf32>
    %49 = arith.subf %41, %48 : vector<8x8xf32>
    %50 = math.exp %49 : vector<8x8xf32>
    %c0_37 = arith.constant 0 : index
    %c1_38 = arith.constant 1 : index
    %51 = vector.load %arg8[%c0_37, %c1_38] : memref<8x4xf32, #tpu.memory_space<vmem>>, vector<8x1xf32>
    %52 = arith.mulf %47, %51 : vector<8x1xf32>
    %cst_39 = arith.constant dense<0.000000e+00> : vector<8xf32>
    %53 = vector.multi_reduction <add>, %50, %cst_39 [1] : vector<8x8xf32> to vector<8xf32>
    %54 = vector.shape_cast %53 : vector<8xf32> to vector<8x1xf32>
    %55 = arith.addf %52, %54 : vector<8x1xf32>
    %c0_40 = arith.constant 0 : index
    %c1_41 = arith.constant 1 : index
    %56 = vector.load %arg8[%c0_40, %c1_41] : memref<8x4xf32, #tpu.memory_space<vmem>>, vector<8x1xf32>
    tpu.vector_store %arg8[%c0_40, %c1_41], %55 {strides = array<i32>} : memref<8x4xf32, #tpu.memory_space<vmem>>, vector<8x1xf32>,
    %c1_42 = arith.constant 1 : index
    %c0_43 = arith.constant 0 : index
    %c0_44 = arith.constant 0 : index
    %57 = vector.load %arg9[%c1_42, %c0_43, %c0_44] : memref<4x8x8xf32, #tpu.memory_space<vmem>>, vector<1x8x8xf32>
    %58 = vector.shape_cast %57 : vector<1x8x8xf32> to vector<8x8xf32>
    %59 = vector.broadcast %47 : vector<8x1xf32> to vector<8x8xf32>
    %60 = arith.mulf %59, %58 : vector<8x8xf32>
    %cst_45 = arith.constant dense<0.000000e+00> : vector<8x8xf32>
    %61 = tpu.matmul %50, %40, %cst_45 {dimension_numbers = #tpu.dot_dimension_numbers<[1], [0], [0], [1], [0, 0, 1, 1], [], []>} : vector<8x8xf32>, vector<8x8xf32>, vector<8x8xf32> -> vector<8x8xf32>
    %62 = arith.addf %60, %61 : vector<8x8xf32>
    %c1_46 = arith.constant 1 : index
    %c0_47 = arith.constant 0 : index
    %c0_48 = arith.constant 0 : index
    %63 = vector.load %arg9[%c1_46, %c0_47, %c0_48] : memref<4x8x8xf32, #tpu.memory_space<vmem>>, vector<1x8x8xf32>
    %64 = vector.shape_cast %63 : vector<1x8x8xf32> to vector<8x8xf32>
    %65 = vector.shape_cast %62 : vector<8x8xf32> to vector<1x8x8xf32>
    tpu.vector_store %arg9[%c1_46, %c0_47, %c0_48], %65 {strides = array<i32>} : memref<4x8x8xf32, #tpu.memory_space<vmem>>, vector<1x8x8xf32>,
    %c0_49 = arith.constant 0 : index
    %c1_50 = arith.constant 1 : index
    %66 = vector.load %arg7[%c0_49, %c1_50] : memref<8x4xf32, #tpu.memory_space<vmem>>, vector<8x1xf32>
    tpu.vector_store %arg7[%c0_49, %c1_50], %45 {strides = array<i32>} : memref<8x4xf32, #tpu.memory_space<vmem>>, vector<8x1xf32>,
    %c0_51 = arith.constant 0 : index
    %c0_52 = arith.constant 0 : index
    %c16 = arith.constant 16 : index
    %67 = vector.load %arg3[%c0_51, %c0_52, %c16] : memref<1x8x32xf32, #tpu.memory_space<vmem>>, vector<1x8x8xf32>
    %68 = vector.shape_cast %67 : vector<1x8x8xf32> to vector<8x8xf32>
    %c0_53 = arith.constant 0 : index
    %c0_54 = arith.constant 0 : index
    %c16_55 = arith.constant 16 : index
    %69 = vector.load %arg4[%c0_53, %c0_54, %c16_55] : memref<1x8x32xf32, #tpu.memory_space<vmem>>, vector<1x8x8xf32>
    %70 = vector.shape_cast %69 : vector<1x8x8xf32> to vector<8x8xf32>
    %c0_56 = arith.constant 0 : index
    %c0_57 = arith.constant 0 : index
    %c16_58 = arith.constant 16 : index
    %71 = vector.load %arg5[%c0_56, %c0_57, %c16_58] : memref<1x8x32xf32, #tpu.memory_space<vmem>>, vector<1x8x8xf32>
    %72 = vector.shape_cast %71 : vector<1x8x8xf32> to vector<8x8xf32>
    %cst_59 = arith.constant dense<0.000000e+00> : vector<8x8xf32>
    %73 = tpu.matmul %68, %70, %cst_59 {dimension_numbers = #tpu.dot_dimension_numbers<[1], [1], [0], [0], [0, 0, 1, 0], [], []>} : vector<8x8xf32>, vector<8x8xf32>, vector<8x8xf32> -> vector<8x8xf32>
    %c0_60 = arith.constant 0 : index
    %c2 = arith.constant 2 : index
    %74 = vector.load %arg7[%c0_60, %c2] : memref<8x4xf32, #tpu.memory_space<vmem>>, vector<8x1xf32>
    %cst_61 = arith.constant dense<0xFF800000> : vector<8xf32>
    %75 = vector.multi_reduction <maximumf>, %73, %cst_61 [1] : vector<8x8xf32> to vector<8xf32>
    %76 = vector.shape_cast %75 : vector<8xf32> to vector<8x1xf32>
    %77 = arith.maximumf %74, %76 : vector<8x1xf32>
    %78 = arith.subf %74, %77 : vector<8x1xf32>
    %79 = math.exp %78 : vector<8x1xf32>
    %80 = vector.broadcast %77 : vector<8x1xf32> to vector<8x8xf32>
    %81 = arith.subf %73, %80 : vector<8x8xf32>
    %82 = math.exp %81 : vector<8x8xf32>
    %c0_62 = arith.constant 0 : index
    %c2_63 = arith.constant 2 : index
    %83 = vector.load %arg8[%c0_62, %c2_63] : memref<8x4xf32, #tpu.memory_space<vmem>>, vector<8x1xf32>
    %84 = arith.mulf %79, %83 : vector<8x1xf32>
    %cst_64 = arith.constant dense<0.000000e+00> : vector<8xf32>
    %85 = vector.multi_reduction <add>, %82, %cst_64 [1] : vector<8x8xf32> to vector<8xf32>
    %86 = vector.shape_cast %85 : vector<8xf32> to vector<8x1xf32>
    %87 = arith.addf %84, %86 : vector<8x1xf32>
    %c0_65 = arith.constant 0 : index
    %c2_66 = arith.constant 2 : index
    %88 = vector.load %arg8[%c0_65, %c2_66] : memref<8x4xf32, #tpu.memory_space<vmem>>, vector<8x1xf32>
    tpu.vector_store %arg8[%c0_65, %c2_66], %87 {strides = array<i32>} : memref<8x4xf32, #tpu.memory_space<vmem>>, vector<8x1xf32>,
    %c2_67 = arith.constant 2 : index
    %c0_68 = arith.constant 0 : index
    %c0_69 = arith.constant 0 : index
    %89 = vector.load %arg9[%c2_67, %c0_68, %c0_69] : memref<4x8x8xf32, #tpu.memory_space<vmem>>, vector<1x8x8xf32>
    %90 = vector.shape_cast %89 : vector<1x8x8xf32> to vector<8x8xf32>
    %91 = vector.broadcast %79 : vector<8x1xf32> to vector<8x8xf32>
    %92 = arith.mulf %91, %90 : vector<8x8xf32>
    %cst_70 = arith.constant dense<0.000000e+00> : vector<8x8xf32>
    %93 = tpu.matmul %82, %72, %cst_70 {dimension_numbers = #tpu.dot_dimension_numbers<[1], [0], [0], [1], [0, 0, 1, 1], [], []>} : vector<8x8xf32>, vector<8x8xf32>, vector<8x8xf32> -> vector<8x8xf32>
    %94 = arith.addf %92, %93 : vector<8x8xf32>
    %c2_71 = arith.constant 2 : index
    %c0_72 = arith.constant 0 : index
    %c0_73 = arith.constant 0 : index
    %95 = vector.load %arg9[%c2_71, %c0_72, %c0_73] : memref<4x8x8xf32, #tpu.memory_space<vmem>>, vector<1x8x8xf32>
    %96 = vector.shape_cast %95 : vector<1x8x8xf32> to vector<8x8xf32>
    %97 = vector.shape_cast %94 : vector<8x8xf32> to vector<1x8x8xf32>
    tpu.vector_store %arg9[%c2_71, %c0_72, %c0_73], %97 {strides = array<i32>} : memref<4x8x8xf32, #tpu.memory_space<vmem>>, vector<1x8x8xf32>,
    %c0_74 = arith.constant 0 : index
    %c2_75 = arith.constant 2 : index
    %98 = vector.load %arg7[%c0_74, %c2_75] : memref<8x4xf32, #tpu.memory_space<vmem>>, vector<8x1xf32>
    tpu.vector_store %arg7[%c0_74, %c2_75], %77 {strides = array<i32>} : memref<8x4xf32, #tpu.memory_space<vmem>>, vector<8x1xf32>,
    %c0_76 = arith.constant 0 : index
    %c0_77 = arith.constant 0 : index
    %c24 = arith.constant 24 : index
    %99 = vector.load %arg3[%c0_76, %c0_77, %c24] : memref<1x8x32xf32, #tpu.memory_space<vmem>>, vector<1x8x8xf32>
    %100 = vector.shape_cast %99 : vector<1x8x8xf32> to vector<8x8xf32>
    %c0_78 = arith.constant 0 : index
    %c0_79 = arith.constant 0 : index
    %c24_80 = arith.constant 24 : index
    %101 = vector.load %arg4[%c0_78, %c0_79, %c24_80] : memref<1x8x32xf32, #tpu.memory_space<vmem>>, vector<1x8x8xf32>
    %102 = vector.shape_cast %101 : vector<1x8x8xf32> to vector<8x8xf32>
    %c0_81 = arith.constant 0 : index
    %c0_82 = arith.constant 0 : index
    %c24_83 = arith.constant 24 : index
    %103 = vector.load %arg5[%c0_81, %c0_82, %c24_83] : memref<1x8x32xf32, #tpu.memory_space<vmem>>, vector<1x8x8xf32>
    %104 = vector.shape_cast %103 : vector<1x8x8xf32> to vector<8x8xf32>
    %cst_84 = arith.constant dense<0.000000e+00> : vector<8x8xf32>
    %105 = tpu.matmul %100, %102, %cst_84 {dimension_numbers = #tpu.dot_dimension_numbers<[1], [1], [0], [0], [0, 0, 1, 0], [], []>} : vector<8x8xf32>, vector<8x8xf32>, vector<8x8xf32> -> vector<8x8xf32>
    %c0_85 = arith.constant 0 : index
    %c3 = arith.constant 3 : index
    %106 = vector.load %arg7[%c0_85, %c3] : memref<8x4xf32, #tpu.memory_space<vmem>>, vector<8x1xf32>
    %cst_86 = arith.constant dense<0xFF800000> : vector<8xf32>
    %107 = vector.multi_reduction <maximumf>, %105, %cst_86 [1] : vector<8x8xf32> to vector<8xf32>
    %108 = vector.shape_cast %107 : vector<8xf32> to vector<8x1xf32>
    %109 = arith.maximumf %106, %108 : vector<8x1xf32>
    %110 = arith.subf %106, %109 : vector<8x1xf32>
    %111 = math.exp %110 : vector<8x1xf32>
    %112 = vector.broadcast %109 : vector<8x1xf32> to vector<8x8xf32>
    %113 = arith.subf %105, %112 : vector<8x8xf32>
    %114 = math.exp %113 : vector<8x8xf32>
    %c0_87 = arith.constant 0 : index
    %c3_88 = arith.constant 3 : index
    %115 = vector.load %arg8[%c0_87, %c3_88] : memref<8x4xf32, #tpu.memory_space<vmem>>, vector<8x1xf32>
    %116 = arith.mulf %111, %115 : vector<8x1xf32>
    %cst_89 = arith.constant dense<0.000000e+00> : vector<8xf32>
    %117 = vector.multi_reduction <add>, %114, %cst_89 [1] : vector<8x8xf32> to vector<8xf32>
    %118 = vector.shape_cast %117 : vector<8xf32> to vector<8x1xf32>
    %119 = arith.addf %116, %118 : vector<8x1xf32>
    %c0_90 = arith.constant 0 : index
    %c3_91 = arith.constant 3 : index
    %120 = vector.load %arg8[%c0_90, %c3_91] : memref<8x4xf32, #tpu.memory_space<vmem>>, vector<8x1xf32>
    tpu.vector_store %arg8[%c0_90, %c3_91], %119 {strides = array<i32>} : memref<8x4xf32, #tpu.memory_space<vmem>>, vector<8x1xf32>,
    %c3_92 = arith.constant 3 : index
    %c0_93 = arith.constant 0 : index
    %c0_94 = arith.constant 0 : index
    %121 = vector.load %arg9[%c3_92, %c0_93, %c0_94] : memref<4x8x8xf32, #tpu.memory_space<vmem>>, vector<1x8x8xf32>
    %122 = vector.shape_cast %121 : vector<1x8x8xf32> to vector<8x8xf32>
    %123 = vector.broadcast %111 : vector<8x1xf32> to vector<8x8xf32>
    %124 = arith.mulf %123, %122 : vector<8x8xf32>
    %cst_95 = arith.constant dense<0.000000e+00> : vector<8x8xf32>
    %125 = tpu.matmul %114, %104, %cst_95 {dimension_numbers = #tpu.dot_dimension_numbers<[1], [0], [0], [1], [0, 0, 1, 1], [], []>} : vector<8x8xf32>, vector<8x8xf32>, vector<8x8xf32> -> vector<8x8xf32>
    %126 = arith.addf %124, %125 : vector<8x8xf32>
    %c3_96 = arith.constant 3 : index
    %c0_97 = arith.constant 0 : index
    %c0_98 = arith.constant 0 : index
    %127 = vector.load %arg9[%c3_96, %c0_97, %c0_98] : memref<4x8x8xf32, #tpu.memory_space<vmem>>, vector<1x8x8xf32>
    %128 = vector.shape_cast %127 : vector<1x8x8xf32> to vector<8x8xf32>
    %129 = vector.shape_cast %126 : vector<8x8xf32> to vector<1x8x8xf32>
    tpu.vector_store %arg9[%c3_96, %c0_97, %c0_98], %129 {strides = array<i32>} : memref<4x8x8xf32, #tpu.memory_space<vmem>>, vector<1x8x8xf32>,
    %c0_99 = arith.constant 0 : index
    %c3_100 = arith.constant 3 : index
    %130 = vector.load %arg7[%c0_99, %c3_100] : memref<8x4xf32, #tpu.memory_space<vmem>>, vector<8x1xf32>
    tpu.vector_store %arg7[%c0_99, %c3_100], %109 {strides = array<i32>} : memref<8x4xf32, #tpu.memory_space<vmem>>, vector<8x1xf32>,
    %c0_i32_101 = arith.constant 0 : i32
    %131 = arith.cmpi eq, %arg2, %c0_i32_101 : i32
    %132 = arith.extui %131 : i1 to i32
    %c0_i32_102 = arith.constant 0 : i32
    %133 = arith.cmpi ne, %132, %c0_i32_102 : i32
    scf.if %133 {
      %c0_103 = arith.constant 0 : index
      %c0_104 = arith.constant 0 : index
      %134 = vector.load %arg8[%c0_103, %c0_104] : memref<8x4xf32, #tpu.memory_space<vmem>>, vector<8x4xf32>
      %cst_105 = arith.constant 1.000000e+00 : f32
      %135 = vector.broadcast %cst_105 : f32 to vector<8x4xf32>
      %136 = arith.divf %135, %134 : vector<8x4xf32>
      %c0_106 = arith.constant 0 : index
      %c0_107 = arith.constant 0 : index
      %c0_108 = arith.constant 0 : index
      %137 = vector.load %arg9[%c0_106, %c0_107, %c0_108] : memref<4x8x8xf32, #tpu.memory_space<vmem>>, vector<1x8x8xf32>
      %138 = vector.shape_cast %137 : vector<1x8x8xf32> to vector<8x8xf32>
      %139 = vector.extract_strided_slice %136 {offsets = [0, 0], sizes = [8, 1], strides = [1, 1]} : vector<8x4xf32> to vector<8x1xf32>
      %140 = vector.broadcast %139 : vector<8x1xf32> to vector<8x8xf32>
      %141 = arith.mulf %138, %140 : vector<8x8xf32>
      %c1_109 = arith.constant 1 : index
      %c0_110 = arith.constant 0 : index
      %c0_111 = arith.constant 0 : index
      %142 = vector.load %arg9[%c1_109, %c0_110, %c0_111] : memref<4x8x8xf32, #tpu.memory_space<vmem>>, vector<1x8x8xf32>
      %143 = vector.shape_cast %142 : vector<1x8x8xf32> to vector<8x8xf32>
      %144 = vector.extract_strided_slice %136 {offsets = [0, 1], sizes = [8, 1], strides = [1, 1]} : vector<8x4xf32> to vector<8x1xf32>
      %145 = vector.broadcast %144 : vector<8x1xf32> to vector<8x8xf32>
      %146 = arith.mulf %143, %145 : vector<8x8xf32>
      %c2_112 = arith.constant 2 : index
      %c0_113 = arith.constant 0 : index
      %c0_114 = arith.constant 0 : index
      %147 = vector.load %arg9[%c2_112, %c0_113, %c0_114] : memref<4x8x8xf32, #tpu.memory_space<vmem>>, vector<1x8x8xf32>
      %148 = vector.shape_cast %147 : vector<1x8x8xf32> to vector<8x8xf32>
      %149 = vector.extract_strided_slice %136 {offsets = [0, 2], sizes = [8, 1], strides = [1, 1]} : vector<8x4xf32> to vector<8x1xf32>
      %150 = vector.broadcast %149 : vector<8x1xf32> to vector<8x8xf32>
      %151 = arith.mulf %148, %150 : vector<8x8xf32>
      %c3_115 = arith.constant 3 : index
      %c0_116 = arith.constant 0 : index
      %c0_117 = arith.constant 0 : index
      %152 = vector.load %arg9[%c3_115, %c0_116, %c0_117] : memref<4x8x8xf32, #tpu.memory_space<vmem>>, vector<1x8x8xf32>
      %153 = vector.shape_cast %152 : vector<1x8x8xf32> to vector<8x8xf32>
      %154 = vector.extract_strided_slice %136 {offsets = [0, 3], sizes = [8, 1], strides = [1, 1]} : vector<8x4xf32> to vector<8x1xf32>
      %155 = vector.broadcast %154 : vector<8x1xf32> to vector<8x8xf32>
      %156 = arith.mulf %153, %155 : vector<8x8xf32>
      %157 = tpu.concatenate %141, %146, %151, %156 in 1 : vector<8x8xf32>, vector<8x8xf32>, vector<8x8xf32>, vector<8x8xf32> -> vector<8x32xf32>
      %c0_118 = arith.constant 0 : index
      %c0_119 = arith.constant 0 : index
      %c0_120 = arith.constant 0 : index
      %158 = vector.load %arg6[%c0_118, %c0_119, %c0_120] : memref<1x8x32xf32, #tpu.memory_space<vmem>>, vector<1x8x32xf32>
      %159 = vector.shape_cast %158 : vector<1x8x32xf32> to vector<8x32xf32>
      %160 = vector.shape_cast %157 : vector<8x32xf32> to vector<1x8x32xf32>
      tpu.vector_store %arg6[%c0_118, %c0_119, %c0_120], %160 {strides = array<i32>} : memref<1x8x32xf32, #tpu.memory_space<vmem>>, vector<1x8x32xf32>,
    } else {
    }
    return
  }
  func.func @transform_0(%arg0: i32, %arg1: i32, %arg2: i32) -> (i32, i32, i32) {
    %c0_i32 = arith.constant 0 : i32
    %c0_i32_0 = arith.constant 0 : i32
    return %arg0, %arg1, %c0_i32 : i32, i32, i32
  }
  func.func @transform_1(%arg0: i32, %arg1: i32, %arg2: i32) -> (i32, i32, i32) {
    %c0_i32 = arith.constant 0 : i32
    %c0_i32_0 = arith.constant 0 : i32
    return %arg0, %arg2, %c0_i32 : i32, i32, i32
  }
  func.func @transform_2(%arg0: i32, %arg1: i32, %arg2: i32) -> (i32, i32, i32) {
    %c0_i32 = arith.constant 0 : i32
    %c0_i32_0 = arith.constant 0 : i32
    return %arg0, %arg2, %c0_i32 : i32, i32, i32
  }
  func.func @transform_3(%arg0: i32, %arg1: i32, %arg2: i32) -> (i32, i32, i32) {
    %c0_i32 = arith.constant 0 : i32
    %c0_i32_0 = arith.constant 0 : i32
    return %arg0, %arg1, %c0_i32 : i32, i32, i32
  }
}

</mosaic_0001>

<llo_original>
// kernel: multi_head_attention.5
$region0: #{multi_head_attention.5}
  #allocation0 [shape = 'u32[]', space=smem, size = 0x4, offset = 0x4, fixed_abs, tag = 'smem constant byte address 0x4 - core index']
  #allocation1 [shape = 'u32[72,128]{1,0:T(1,128)}', space=vmem, size = 0x9000, scoped, tag = 'internal scratch']
  #allocation2 [shape = 'f32[16,32]{1,0:T(8,128)}', space=vmem, size = 0x2000, scoped, tag = 'scratch operand']
  %s0 = inlined_call_operand.vmem [shape: f32[16,32], index: 0, kind: input, shape index: {}]
  %s1 = inlined_call_operand.vmem [shape: f32[32,32], index: 1, kind: input, shape index: {}]
  %s2 = inlined_call_operand.vmem [shape: f32[1,32], index: 2, kind: input, shape index: {}]
  %s3 = inlined_call_operand.vmem [shape: f32[16,32], index: 3, kind: output, shape index: {}]
  %s4 = sld [smem:[#allocation0]]
  $region30: #{multi_head_attention.5} parent=0
    _
  %s6 = ssub.s32 1, %s4
  %s7 = scalar_select 0, %s6, %s4
  // Predicated region
  $region2: #{multi_head_attention.5} parent=0 // pred_check
    _
  $region3: #{multi_head_attention.5} parent=0 // pred_check_branch
    %9 = sbr.rel (0) target = $region5
  $region4: #{multi_head_attention.5} parent=0 // pred_region
    _
  $region5: #{multi_head_attention.5} parent=0 // pred_fallthru
    _
  // Predicated region
  $region6: #{multi_head_attention.5} parent=0 // pred_check
    _
  $region7: #{multi_head_attention.5} parent=0 // pred_check_branch
    %11 = sbr.rel (0) target = $region9
  $region8: #{multi_head_attention.5} parent=0 // pred_region
    _
  $region9: #{multi_head_attention.5} parent=0 // pred_fallthru
    _
  // Predicated region
  $region10: #{multi_head_attention.5} parent=0 // pred_check
    _
  $region11: #{multi_head_attention.5} parent=0 // pred_check_branch
    %13 = sbr.rel (0) target = $region13
  $region12: #{multi_head_attention.5} parent=0 // pred_region
    _
  $region13: #{multi_head_attention.5} parent=0 // pred_fallthru
    _
  %p14 = scmp.eq.s32.totalorder 0, 0
  // Predicated region
  $region14: #{multi_head_attention.5} parent=0 // pred_check
    %p15 = pneg %p14
  $region15: #{multi_head_attention.5} parent=0 // pred_check_branch
    %17 = sbr.rel (%p15) target = $region17
  $region16: #{multi_head_attention.5} parent=0 // pred_region
    %vm18 = vcmask 261120
    %19 = vst.msk [vmem:[#allocation2] sm:$0xff] %vm18, 0.0
    %20 = vst.msk [vmem:[#allocation2 + $0x8] sm:$0xff] %vm18, 0.0
  $region17: #{multi_head_attention.5} parent=0 // pred_fallthru
    _
  %v21 = vld [vmem:[#allocation2] sm:$0xff]
  %v22 = vld [vmem:[#allocation2 + $0x8] sm:$0xff]
  %v23 = vld [vmem:[%s0] sm:$0xff]
  %v24 = vld [vmem:[%s0 + $0x8] sm:$0xff]
  %v25 = vld [vmem:[%s1] sm:$0xff]
  %v26 = vld [vmem:[%s1 + $0x8] sm:$0xff]
  %v27 = vld [vmem:[%s1 + $0x10] sm:$0xff]
  %v28 = vld [vmem:[%s1 + $0x18] sm:$0xff]
  %vm29 = vcmask 261120
  %v31 = vsel %vm29, %v23, 0
  %v34 = vsel %vm29, %v24, 0
  %v37 = vsel %vm29, %v25, 0
  %v40 = vsel %vm29, %v26, 0
  %v43 = vsel %vm29, %v27, 0
  %v46 = vsel %vm29, %v28, 0
  %48 = vmatpush.xpose.msra.mxu0 0.0
  %49 = vmatpush.xpose.msra.mxu0 0.0
  %50 = vmatpush.xpose.msra.mxu0 0.0
  %51 = vmatpush.xpose.msra.mxu0 0.0
  %52 = vmatpush.xpose.msra.mxu0 0.0
  %53 = vmatpush.xpose.msra.mxu0 0.0
  %54 = vmatpush.xpose.msra.mxu0 0.0
  %55 = vmatpush.xpose.msra.mxu0 0.0
  %56 = vmatpush.xpose.msra.mxu0 0.0
  %57 = vmatpush.xpose.msra.mxu0 0.0
  %58 = vmatpush.xpose.msra.mxu0 0.0
  %59 = vmatpush.xpose.msra.mxu0 0.0
  %60 = vmatpush.xpose.msra.mxu0 %v46
  %61 = vmatpush.xpose.msra.mxu0 %v43
  %62 = vmatpush.xpose.msra.mxu0 %v40
  %63 = vmatpush.xpose.msra.mxu0 %v37
  %64 = vmatmul.f32.gmra.mxu0 %v31
  %v65 = vpop.f32.mrf.mxu0
  %v66 = vadd.f32 0.0, %v65
  %67 = vmatmul.f32.gmra.mxu0 %v34
  %v68 = vpop.f32.mrf.mxu0
  %v69 = vadd.f32 0.0, %v68
  %70 = vdwg.mxu0
  %v71 = vadd.f32 %v21, %v66
  %v72 = vadd.f32 %v22, %v69
  %73 = vst.msk [vmem:[#allocation2] sm:$0xff] %vm29, %v71
  %74 = vst.msk [vmem:[#allocation2 + $0x8] sm:$0xff] %vm29, %v72
  // Predicated region
  $region18: #{multi_head_attention.5} parent=0 // pred_check
    %p75 = pneg %p14
  $region19: #{multi_head_attention.5} parent=0 // pred_check_branch
    %77 = sbr.rel (%p75) target = $region21
  $region20: #{multi_head_attention.5} parent=0 // pred_region
    %v78 = vld [vmem:[#allocation2] sm:$0xff]
    %v79 = vld [vmem:[#allocation2 + $0x8] sm:$0xff]
    %v80 = vld [vmem:[%s2] sm:$0x1]
    %v82 = vperm.slane %v80, 0
    %v84 = vadd.f32 %v78, %v82
    %v85 = vadd.f32 %v79, %v82
    %86 = vst.msk [vmem:[%s3] sm:$0xff] %vm29, %v84
    %87 = vst.msk [vmem:[%s3 + $0x8] sm:$0xff] %vm29, %v85
  $region21: #{multi_head_attention.5} parent=0 // pred_fallthru
    _
  // Predicated region
  $region22: #{multi_head_attention.5} parent=0 // pred_check
    _
  $region23: #{multi_head_attention.5} parent=0 // pred_check_branch
    %89 = sbr.rel (0) target = $region25
  $region24: #{multi_head_attention.5} parent=0 // pred_region
    _
  $region25: #{multi_head_attention.5} parent=0 // pred_fallthru
    _
  // Predicated region
  $region26: #{multi_head_attention.5} parent=0 // pred_check
    _
  $region27: #{multi_head_attention.5} parent=0 // pred_check_branch
    %91 = sbr.rel (0) target = $region29
  $region28: #{multi_head_attention.5} parent=0 // pred_region
    _
  $region29: #{multi_head_attention.5} parent=0 // pred_fallthru
    _

// kernel: multi_head_attention.7
$region0: #{multi_head_attention.7}
  #allocation0 [shape = 'u32[]', space=smem, size = 0x4, offset = 0x4, fixed_abs, tag = 'smem constant byte address 0x4 - core index']
  #allocation1 [shape = 'u32[72,128]{1,0:T(1,128)}', space=vmem, size = 0x9000, scoped, tag = 'internal scratch']
  #allocation2 [shape = 'f32[16,32]{1,0:T(8,128)}', space=vmem, size = 0x2000, scoped, tag = 'scratch operand']
  %s0 = inlined_call_operand.hbm [shape: f32[16,32], index: 0, kind: input, shape index: {}]
  %s1 = inlined_call_operand.vmem [shape: f32[32,32], index: 1, kind: input, shape index: {}]
  %s2 = inlined_call_operand.vmem [shape: f32[1,32], index: 2, kind: input, shape index: {}]
  %s3 = inlined_call_operand.vmem [shape: f32[16,32], index: 3, kind: output, shape index: {}]
  %s4 = sld [smem:[#allocation0]]
  $region34: #{multi_head_attention.7} parent=0
    _
  %s6 = ssub.s32 1, %s4
  %s7 = scalar_select 0, %s6, %s4
  $region1: #{multi_head_attention.7} parent=0
    #allocation3 [shape = 'u8[8192]{0}', space=vmem, size = 0x2000, scoped, tag = 'input window, operand 0, single buffered']
    #allocation4 [shape = 's32[1]{0}', space=sflag, size = 0x4, scoped, tag = 'scoped memory for multi_head_attention.7']
    %8 = vsyncpa [#allocation4], 0
    // Predicated region
    $region2: #{multi_head_attention.7} parent=1 // pred_check
      _
    $region3: #{multi_head_attention.7} parent=1 // pred_check_branch
      %10 = sbr.rel (0) target = $region5
    $region4: #{multi_head_attention.7} parent=1 // pred_region
      %12 = vsyncadd [#allocation4], 0
      %s13 = sshll.u32 %s0, 4
      %s14 = int_to_ptr.hbm [resolvable:$true] %s13
      %s15 = sshll.u32 [#allocation3], 4
      %s16 = int_to_ptr.vmem [resolvable:$true] %s15
      %21 = dma.hbm_to_vmem [thread:$0]  %s14, 256, %s16, [#allocation4], 128, 128, 8
    $region5: #{multi_head_attention.7} parent=1 // pred_fallthru
      _
    // Predicated region
    $region6: #{multi_head_attention.7} parent=1 // pred_check
      _
    $region7: #{multi_head_attention.7} parent=1 // pred_check_branch
      %23 = sbr.rel (0) target = $region9
    $region8: #{multi_head_attention.7} parent=1 // pred_region
      _
    $region9: #{multi_head_attention.7} parent=1 // pred_fallthru
      _
    // Predicated region
    $region10: #{multi_head_attention.7} parent=1 // pred_check
      _
    $region11: #{multi_head_attention.7} parent=1 // pred_check_branch
      %25 = sbr.rel (0) target = $region13
    $region12: #{multi_head_attention.7} parent=1 // pred_region
      _
    $region13: #{multi_head_attention.7} parent=1 // pred_fallthru
      _
    // Predicated region
    $region14: #{multi_head_attention.7} parent=1 // pred_check
      _
    $region15: #{multi_head_attention.7} parent=1 // pred_check_branch
      %27 = sbr.rel (0) target = $region17
    $region16: #{multi_head_attention.7} parent=1 // pred_region
      %29 = dma.done [#allocation4], 256
    $region17: #{multi_head_attention.7} parent=1 // pred_fallthru
      _
    %p30 = scmp.eq.s32.totalorder 0, 0
    // Predicated region
    $region18: #{multi_head_attention.7} parent=1 // pred_check
      %p31 = pneg %p30
    $region19: #{multi_head_attention.7} parent=1 // pred_check_branch
      %33 = sbr.rel (%p31) target = $region21
    $region20: #{multi_head_attention.7} parent=1 // pred_region
      %vm34 = vcmask 261120
      %35 = vst.msk [vmem:[#allocation2] sm:$0xff] %vm34, 0.0
      %36 = vst.msk [vmem:[#allocation2 + $0x8] sm:$0xff] %vm34, 0.0
    $region21: #{multi_head_attention.7} parent=1 // pred_fallthru
      _
    %v37 = vld [vmem:[#allocation2] sm:$0xff]
    %v38 = vld [vmem:[#allocation2 + $0x8] sm:$0xff]
    %v39 = vld [vmem:[#allocation3] sm:$0xff]
    %v40 = vld [vmem:[#allocation3 + $0x8] sm:$0xff]
    %v41 = vld [vmem:[%s1] sm:$0xff]
    %v42 = vld [vmem:[%s1 + $0x8] sm:$0xff]
    %v43 = vld [vmem:[%s1 + $0x10] sm:$0xff]
    %v44 = vld [vmem:[%s1 + $0x18] sm:$0xff]
    %vm45 = vcmask 261120
    %v47 = vsel %vm45, %v39, 0
    %v50 = vsel %vm45, %v40, 0
    %v53 = vsel %vm45, %v41, 0
    %v56 = vsel %vm45, %v42, 0
    %v59 = vsel %vm45, %v43, 0
    %v62 = vsel %vm45, %v44, 0
    %64 = vmatpush.xpose.msra.mxu0 0.0
    %65 = vmatpush.xpose.msra.mxu0 0.0
    %66 = vmatpush.xpose.msra.mxu0 0.0
    %67 = vmatpush.xpose.msra.mxu0 0.0
    %68 = vmatpush.xpose.msra.mxu0 0.0
    %69 = vmatpush.xpose.msra.mxu0 0.0
    %70 = vmatpush.xpose.msra.mxu0 0.0
    %71 = vmatpush.xpose.msra.mxu0 0.0
    %72 = vmatpush.xpose.msra.mxu0 0.0
    %73 = vmatpush.xpose.msra.mxu0 0.0
    %74 = vmatpush.xpose.msra.mxu0 0.0
    %75 = vmatpush.xpose.msra.mxu0 0.0
    %76 = vmatpush.xpose.msra.mxu0 %v62
    %77 = vmatpush.xpose.msra.mxu0 %v59
    %78 = vmatpush.xpose.msra.mxu0 %v56
    %79 = vmatpush.xpose.msra.mxu0 %v53
    %80 = vmatmul.f32.gmra.mxu0 %v47
    %v81 = vpop.f32.mrf.mxu0
    %v82 = vadd.f32 0.0, %v81
    %83 = vmatmul.f32.gmra.mxu0 %v50
    %v84 = vpop.f32.mrf.mxu0
    %v85 = vadd.f32 0.0, %v84
    %86 = vdwg.mxu0
    %v87 = vadd.f32 %v37, %v82
    %v88 = vadd.f32 %v38, %v85
    %89 = vst.msk [vmem:[#allocation2] sm:$0xff] %vm45, %v87
    %90 = vst.msk [vmem:[#allocation2 + $0x8] sm:$0xff] %vm45, %v88
    // Predicated region
    $region22: #{multi_head_attention.7} parent=1 // pred_check
      %p91 = pneg %p30
    $region23: #{multi_head_attention.7} parent=1 // pred_check_branch
      %93 = sbr.rel (%p91) target = $region25
    $region24: #{multi_head_attention.7} parent=1 // pred_region
      %v94 = vld [vmem:[#allocation2] sm:$0xff]
      %v95 = vld [vmem:[#allocation2 + $0x8] sm:$0xff]
      %v96 = vld [vmem:[%s2] sm:$0x1]
      %v98 = vperm.slane %v96, 0
      %v100 = vadd.f32 %v94, %v98
      %v101 = vadd.f32 %v95, %v98
      %102 = vst.msk [vmem:[%s3] sm:$0xff] %vm45, %v100
      %103 = vst.msk [vmem:[%s3 + $0x8] sm:$0xff] %vm45, %v101
    $region25: #{multi_head_attention.7} parent=1 // pred_fallthru
      _
    // Predicated region
    $region26: #{multi_head_attention.7} parent=1 // pred_check
      _
    $region27: #{multi_head_attention.7} parent=1 // pred_check_branch
      %105 = sbr.rel (0) target = $region29
    $region28: #{multi_head_attention.7} parent=1 // pred_region
      _
    $region29: #{multi_head_attention.7} parent=1 // pred_fallthru
      _
    // Predicated region
    $region30: #{multi_head_attention.7} parent=1 // pred_check
      _
    $region31: #{multi_head_attention.7} parent=1 // pred_check_branch
      %107 = sbr.rel (0) target = $region33
    $region32: #{multi_head_attention.7} parent=1 // pred_region
      _
    $region33: #{multi_head_attention.7} parent=1 // pred_fallthru
      _
    %108 = vsyncpa [#allocation4], 1

// kernel: multi_head_attention.9
$region0: #{multi_head_attention.9}
  #allocation0 [shape = 'u32[]', space=smem, size = 0x4, offset = 0x4, fixed_abs, tag = 'smem constant byte address 0x4 - core index']
  #allocation1 [shape = 'u32[72,128]{1,0:T(1,128)}', space=vmem, size = 0x9000, scoped, tag = 'internal scratch']
  #allocation2 [shape = 'f32[16,32]{1,0:T(8,128)}', space=vmem, size = 0x2000, scoped, tag = 'scratch operand']
  %s0 = inlined_call_operand.vmem [shape: f32[16,32], index: 0, kind: input, shape index: {}]
  %s1 = inlined_call_operand.vmem [shape: f32[32,32], index: 1, kind: input, shape index: {}]
  %s2 = inlined_call_operand.vmem [shape: f32[1,32], index: 2, kind: input, shape index: {}]
  %s3 = inlined_call_operand.hbm [shape: f32[16,32], index: 3, kind: output, shape index: {}]
  %s4 = sld [smem:[#allocation0]]
  $region30: #{multi_head_attention.9} parent=0
    _
  %s6 = ssub.s32 1, %s4
  %s7 = scalar_select 0, %s6, %s4
  $region1: #{multi_head_attention.9} parent=0
    #allocation3 [shape = 'u8[8192]{0}', space=vmem, size = 0x2000, scoped, tag = 'output window, operand 0, single buffered']
    #allocation4 [shape = 's32[1]{0}', space=sflag, size = 0x4, scoped, tag = 'scoped memory for multi_head_attention.9']
    %8 = vsyncpa [#allocation4], 0
    // Predicated region
    $region2: #{multi_head_attention.9} parent=1 // pred_check
      _
    $region3: #{multi_head_attention.9} parent=1 // pred_check_branch
      %10 = sbr.rel (0) target = $region5
    $region4: #{multi_head_attention.9} parent=1 // pred_region
      _
    $region5: #{multi_head_attention.9} parent=1 // pred_fallthru
      _
    // Predicated region
    $region6: #{multi_head_attention.9} parent=1 // pred_check
      _
    $region7: #{multi_head_attention.9} parent=1 // pred_check_branch
      %12 = sbr.rel (0) target = $region9
    $region8: #{multi_head_attention.9} parent=1 // pred_region
      _
    $region9: #{multi_head_attention.9} parent=1 // pred_fallthru
      _
    // Predicated region
    $region10: #{multi_head_attention.9} parent=1 // pred_check
      _
    $region11: #{multi_head_attention.9} parent=1 // pred_check_branch
      %14 = sbr.rel (0) target = $region13
    $region12: #{multi_head_attention.9} parent=1 // pred_region
      _
    $region13: #{multi_head_attention.9} parent=1 // pred_fallthru
      _
    %p15 = scmp.eq.s32.totalorder 0, 0
    // Predicated region
    $region14: #{multi_head_attention.9} parent=1 // pred_check
      %p16 = pneg %p15
    $region15: #{multi_head_attention.9} parent=1 // pred_check_branch
      %18 = sbr.rel (%p16) target = $region17
    $region16: #{multi_head_attention.9} parent=1 // pred_region
      %vm19 = vcmask 261120
      %20 = vst.msk [vmem:[#allocation2] sm:$0xff] %vm19, 0.0
      %21 = vst.msk [vmem:[#allocation2 + $0x8] sm:$0xff] %vm19, 0.0
    $region17: #{multi_head_attention.9} parent=1 // pred_fallthru
      _
    %v22 = vld [vmem:[#allocation2] sm:$0xff]
    %v23 = vld [vmem:[#allocation2 + $0x8] sm:$0xff]
    %v24 = vld [vmem:[%s0] sm:$0xff]
    %v25 = vld [vmem:[%s0 + $0x8] sm:$0xff]
    %v26 = vld [vmem:[%s1] sm:$0xff]
    %v27 = vld [vmem:[%s1 + $0x8] sm:$0xff]
    %v28 = vld [vmem:[%s1 + $0x10] sm:$0xff]
    %v29 = vld [vmem:[%s1 + $0x18] sm:$0xff]
    %vm30 = vcmask 261120
    %v32 = vsel %vm30, %v24, 0
    %v35 = vsel %vm30, %v25, 0
    %v38 = vsel %vm30, %v26, 0
    %v41 = vsel %vm30, %v27, 0
    %v44 = vsel %vm30, %v28, 0
    %v47 = vsel %vm30, %v29, 0
    %49 = vmatpush.xpose.msra.mxu0 0.0
    %50 = vmatpush.xpose.msra.mxu0 0.0
    %51 = vmatpush.xpose.msra.mxu0 0.0
    %52 = vmatpush.xpose.msra.mxu0 0.0
    %53 = vmatpush.xpose.msra.mxu0 0.0
    %54 = vmatpush.xpose.msra.mxu0 0.0
    %55 = vmatpush.xpose.msra.mxu0 0.0
    %56 = vmatpush.xpose.msra.mxu0 0.0
    %57 = vmatpush.xpose.msra.mxu0 0.0
    %58 = vmatpush.xpose.msra.mxu0 0.0
    %59 = vmatpush.xpose.msra.mxu0 0.0
    %60 = vmatpush.xpose.msra.mxu0 0.0
    %61 = vmatpush.xpose.msra.mxu0 %v47
    %62 = vmatpush.xpose.msra.mxu0 %v44
    %63 = vmatpush.xpose.msra.mxu0 %v41
    %64 = vmatpush.xpose.msra.mxu0 %v38
    %65 = vmatmul.f32.gmra.mxu0 %v32
    %v66 = vpop.f32.mrf.mxu0
    %v67 = vadd.f32 0.0, %v66
    %68 = vmatmul.f32.gmra.mxu0 %v35
    %v69 = vpop.f32.mrf.mxu0
    %v70 = vadd.f32 0.0, %v69
    %71 = vdwg.mxu0
    %v72 = vadd.f32 %v22, %v67
    %v73 = vadd.f32 %v23, %v70
    %74 = vst.msk [vmem:[#allocation2] sm:$0xff] %vm30, %v72
    %75 = vst.msk [vmem:[#allocation2 + $0x8] sm:$0xff] %vm30, %v73
    // Predicated region
    $region18: #{multi_head_attention.9} parent=1 // pred_check
      %p76 = pneg %p15
    $region19: #{multi_head_attention.9} parent=1 // pred_check_branch
      %78 = sbr.rel (%p76) target = $region21
    $region20: #{multi_head_attention.9} parent=1 // pred_region
      %v79 = vld [vmem:[#allocation2] sm:$0xff]
      %v80 = vld [vmem:[#allocation2 + $0x8] sm:$0xff]
      %v81 = vld [vmem:[%s2] sm:$0x1]
      %v83 = vperm.slane %v81, 0
      %v85 = vadd.f32 %v79, %v83
      %v86 = vadd.f32 %v80, %v83
      %87 = vst.msk [vmem:[#allocation3] sm:$0xff] %vm30, %v85
      %88 = vst.msk [vmem:[#allocation3 + $0x8] sm:$0xff] %vm30, %v86
    $region21: #{multi_head_attention.9} parent=1 // pred_fallthru
      _
    // Predicated region
    $region22: #{multi_head_attention.9} parent=1 // pred_check
      _
    $region23: #{multi_head_attention.9} parent=1 // pred_check_branch
      %90 = sbr.rel (0) target = $region25
    $region24: #{multi_head_attention.9} parent=1 // pred_region
      %92 = vsyncadd [#allocation4], 0
      %s93 = sshll.u32 [#allocation3], 4
      %s94 = int_to_ptr.vmem [resolvable:$true] %s93
      %s95 = sshll.u32 %s3, 4
      %s96 = int_to_ptr.hbm [resolvable:$true] %s95
      %101 = dma.vmem_to_hbm [thread:$0]  %s94, 256, %s96, [#allocation4], 128, 128, 8
    $region25: #{multi_head_attention.9} parent=1 // pred_fallthru
      _
    // Predicated region
    $region26: #{multi_head_attention.9} parent=1 // pred_check
      _
    $region27: #{multi_head_attention.9} parent=1 // pred_check_branch
      %103 = sbr.rel (0) target = $region29
    $region28: #{multi_head_attention.9} parent=1 // pred_region
      %105 = dma.done [#allocation4], 256
    $region29: #{multi_head_attention.9} parent=1 // pred_fallthru
      _
    %106 = vsyncpa [#allocation4], 1

// kernel: multi_head_attention.8
$region0: #{multi_head_attention.8}
  #allocation0 [shape = 'u32[]', space=smem, size = 0x4, offset = 0x4, fixed_abs, tag = 'smem constant byte address 0x4 - core index']
  #allocation1 [shape = 'u32[72,128]{1,0:T(1,128)}', space=vmem, size = 0x9000, scoped, tag = 'internal scratch']
  #allocation2 [shape = 'f32[8,4]{1,0:T(8,128)}', space=vmem, size = 0x1000, scoped, tag = 'scratch operand']
  #allocation3 [shape = 'f32[8,4]{1,0:T(8,128)}', space=vmem, size = 0x1000, scoped, tag = 'scratch operand']
  #allocation4 [shape = 'f32[4,8,8]{2,1,0:T(8,128)}', space=vmem, size = 0x4000, scoped, tag = 'scratch operand']
  %s0 = inlined_call_operand.vmem [shape: f32[2,8,32], index: 0, kind: input, shape index: {}]
  %s1 = inlined_call_operand.vmem [shape: f32[2,8,32], index: 1, kind: input, shape index: {}]
  %s2 = inlined_call_operand.vmem [shape: f32[2,8,32], index: 2, kind: input, shape index: {}]
  %s3 = inlined_call_operand.vmem [shape: f32[2,8,32], index: 3, kind: output, shape index: {}]
  %s4 = sld [smem:[#allocation0]]
  $region53: #{multi_head_attention.8} parent=0
    _
  %s6 = ssub.s32 1, %s4
  %s7 = scalar_select 0, %s6, %s4
  loop: start=0, step=1, limit=4
  $region2: #{multi_head_attention.8} parent=0 // loop_pre_header
    _
  $region3: #{multi_head_attention.8} parent=0 // loop_header
    %s9 = sphi 0, %s13
    %p10 = scmp.ge.s32.totalorder %s9, 4
    %s16 = sphi 0, %s35
    %s17 = sphi 0, %s31
    %s18 = sphi 0, %s27
    %s19 = sphi 0, %s16
    %s20 = sphi 0, %s17
    %s21 = sphi 0, %s18
    %s22 = sphi 0, %s19
    %s23 = sphi 0, %s20
    %s24 = sphi 0, %s21
    %s40 = sphi 0, %s42
    %s43 = sphi 0, %s40
    %s44 = sphi 0, %s43
    %s60 = sphi 0, %s44
    %s68 = sphi 0, %s70
    %s71 = sphi 0, %s68
    %s72 = sphi 0, %s71
    %s88 = sphi 0, %s72
    %s96 = sphi 0, %s98
    %s99 = sphi 0, %s96
    %s100 = sphi 0, %s99
    %s116 = sphi 0, %s100
    %s124 = sphi 0, %s126
    %s127 = sphi 0, %s124
    %s128 = sphi 0, %s127
    %s144 = sphi 0, %s128
  $region4: #{multi_head_attention.8} parent=0 // loop_header_branch
    %12 = sbr.rel (%p10) target = $region8
  $region5: #{multi_head_attention.8} parent=0 // loop_body
    %s14 = ssub.s32 %s9, 1
    %s15 = ssub.s32 %s9, 2
    %s25 = sadd.s32 1, %s18
    %p26 = scmp.ge.s32.totalorder %s25, 1
    %s27 = scalar_select %p26, 0, %s25
    %s28 = sadd.s32 1, %s17
    %s29 = scalar_select %p26, %s28, %s17
    %p30 = scmp.ge.s32.totalorder %s29, 1
    %s31 = scalar_select %p30, 0, %s29
    %s32 = sadd.s32 1, %s16
    %s33 = scalar_select %p30, %s32, %s16
    %p34 = scmp.ge.s32.totalorder %s33, 2
    %s35 = scalar_select %p34, 0, %s33
    %s36 = ssub.s32 %s16, %s35
    %s37 = ssub.s32 %s17, %s31
    %s38 = sor.u32 %s36, %s37
    %p39 = scmp.eq.s32.totalorder %s38, 0
    %s41 = sadd.s32 %s40, 1
    %s42 = scalar_select %p39, %s40, %s41
    %p45 = pneg %p39
    %p46 = scmp.eq.s32.totalorder %s9, 1
    %p47 = por %p45, %p46
    %p48 = scmp.ne.s32.totalorder %s40, %s43
    %p49 = scmp.eq.s32.totalorder %s9, 0
    %p50 = por %p48, %p49
    %p51 = scmp.ne.s32.totalorder %s40, %s43
    %p52 = scmp.eq.s32.totalorder %s14, 1
    %p53 = por %p51, %p52
    %p54 = scmp.ne.s32.totalorder %s43, %s44
    %p55 = scmp.eq.s32.totalorder %s14, 0
    %p56 = por %p54, %p55
    %p57 = scmp.ne.s32.totalorder %s43, %s44
    %p58 = scmp.eq.s32.totalorder %s15, 1
    %p59 = por %p57, %p58
    %p61 = scmp.ne.s32.totalorder %s44, %s60
    %p62 = scmp.eq.s32.totalorder %s15, 0
    %p63 = por %p61, %p62
    %s64 = ssub.s32 %s16, %s35
    %s65 = ssub.s32 %s18, %s27
    %s66 = sor.u32 %s64, %s65
    %p67 = scmp.eq.s32.totalorder %s66, 0
    %s69 = sadd.s32 %s68, 1
    %s70 = scalar_select %p67, %s68, %s69
    %p73 = pneg %p67
    %p74 = scmp.eq.s32.totalorder %s9, 1
    %p75 = por %p73, %p74
    %p76 = scmp.ne.s32.totalorder %s68, %s71
    %p77 = scmp.eq.s32.totalorder %s9, 0
    %p78 = por %p76, %p77
    %p79 = scmp.ne.s32.totalorder %s68, %s71
    %p80 = scmp.eq.s32.totalorder %s14, 1
    %p81 = por %p79, %p80
    %p82 = scmp.ne.s32.totalorder %s71, %s72
    %p83 = scmp.eq.s32.totalorder %s14, 0
    %p84 = por %p82, %p83
    %p85 = scmp.ne.s32.totalorder %s71, %s72
    %p86 = scmp.eq.s32.totalorder %s15, 1
    %p87 = por %p85, %p86
    %p89 = scmp.ne.s32.totalorder %s72, %s88
    %p90 = scmp.eq.s32.totalorder %s15, 0
    %p91 = por %p89, %p90
    %s92 = ssub.s32 %s16, %s35
    %s93 = ssub.s32 %s18, %s27
    %s94 = sor.u32 %s92, %s93
    %p95 = scmp.eq.s32.totalorder %s94, 0
    %s97 = sadd.s32 %s96, 1
    %s98 = scalar_select %p95, %s96, %s97
    %p101 = pneg %p95
    %p102 = scmp.eq.s32.totalorder %s9, 1
    %p103 = por %p101, %p102
    %p104 = scmp.ne.s32.totalorder %s96, %s99
    %p105 = scmp.eq.s32.totalorder %s9, 0
    %p106 = por %p104, %p105
    %p107 = scmp.ne.s32.totalorder %s96, %s99
    %p108 = scmp.eq.s32.totalorder %s14, 1
    %p109 = por %p107, %p108
    %p110 = scmp.ne.s32.totalorder %s99, %s100
    %p111 = scmp.eq.s32.totalorder %s14, 0
    %p112 = por %p110, %p111
    %p113 = scmp.ne.s32.totalorder %s99, %s100
    %p114 = scmp.eq.s32.totalorder %s15, 1
    %p115 = por %p113, %p114
    %p117 = scmp.ne.s32.totalorder %s100, %s116
    %p118 = scmp.eq.s32.totalorder %s15, 0
    %p119 = por %p117, %p118
    %s120 = ssub.s32 %s16, %s35
    %s121 = ssub.s32 %s17, %s31
    %s122 = sor.u32 %s120, %s121
    %p123 = scmp.eq.s32.totalorder %s122, 0
    %s125 = sadd.s32 %s124, 1
    %s126 = scalar_select %p123, %s124, %s125
    %p129 = pneg %p123
    %p130 = scmp.eq.s32.totalorder %s9, 1
    %p131 = por %p129, %p130
    %p132 = scmp.ne.s32.totalorder %s124, %s127
    %p133 = scmp.eq.s32.totalorder %s9, 0
    %p134 = por %p132, %p133
    %p135 = scmp.ne.s32.totalorder %s124, %s127
    %p136 = scmp.eq.s32.totalorder %s14, 1
    %p137 = por %p135, %p136
    %p138 = scmp.ne.s32.totalorder %s127, %s128
    %p139 = scmp.eq.s32.totalorder %s14, 0
    %p140 = por %p138, %p139
    %p141 = scmp.ne.s32.totalorder %s127, %s128
    %p142 = scmp.eq.s32.totalorder %s15, 1
    %p143 = por %p141, %p142
    %p145 = scmp.ne.s32.totalorder %s128, %s144
    %p146 = scmp.eq.s32.totalorder %s15, 0
    %p147 = por %p145, %p146
    %p148 = scmp.le.s32.totalorder 1, %s9
    %p149 = scmp.lt.s32.totalorder %s9, 3
    %p150 = pnand %p148, %p149
    %p151 = pneg %p150
    // Predicated region
    $region9: #{multi_head_attention.8} parent=5 // pred_check
      _
    $region10: #{multi_head_attention.8} parent=5 // pred_check_branch
      %153 = sbr.rel (%p150) target = $region12
    $region11: #{multi_head_attention.8} parent=5 // pred_region
      %s154 = ssub.s32 %s9, 1
    $region12: #{multi_head_attention.8} parent=5 // pred_fallthru
      _
    %p155 = scmp.lt.s32.totalorder %s9, 2
    // Predicated region
    $region13: #{multi_head_attention.8} parent=5 // pred_check
      %p156 = pneg %p155
    $region14: #{multi_head_attention.8} parent=5 // pred_check_branch
      %158 = sbr.rel (%p156) target = $region16
    $region15: #{multi_head_attention.8} parent=5 // pred_region
      // Predicated region
      $region17: #{multi_head_attention.8} parent=15 // pred_check
        %p159 = pneg %p50
      $region18: #{multi_head_attention.8} parent=15 // pred_check_branch
        %161 = sbr.rel (%p159) target = $region20
      $region19: #{multi_head_attention.8} parent=15 // pred_region
        %p162 = scmp.lt.s32.totalorder %s16, 1
        %s163 = scalar_select %p162, %s16, 1
        %p164 = scmp.lt.s32.totalorder %s17, 0
        %s165 = scalar_select %p164, %s17, 0
        %s166 = sadd.s32 %s165, %s163
        %s167 = smul.addr %s166, 8
        %s168 = scalar_lea.vmem %s0, %s167
      $region20: #{multi_head_attention.8} parent=15 // pred_fallthru
        _
      // Predicated region
      $region21: #{multi_head_attention.8} parent=15 // pred_check
        %p169 = pneg %p78
      $region22: #{multi_head_attention.8} parent=15 // pred_check_branch
        %171 = sbr.rel (%p169) target = $region24
      $region23: #{multi_head_attention.8} parent=15 // pred_region
        %p172 = scmp.lt.s32.totalorder %s16, 1
        %s173 = scalar_select %p172, %s16, 1
        %p174 = scmp.lt.s32.totalorder %s18, 0
        %s175 = scalar_select %p174, %s18, 0
        %s176 = sadd.s32 %s175, %s173
        %s177 = smul.addr %s176, 8
        %s178 = scalar_lea.vmem %s1, %s177
      $region24: #{multi_head_attention.8} parent=15 // pred_fallthru
        _
      // Predicated region
      $region25: #{multi_head_attention.8} parent=15 // pred_check
        %p179 = pneg %p106
      $region26: #{multi_head_attention.8} parent=15 // pred_check_branch
        %181 = sbr.rel (%p179) target = $region28
      $region27: #{multi_head_attention.8} parent=15 // pred_region
        %p182 = scmp.lt.s32.totalorder %s16, 1
        %s183 = scalar_select %p182, %s16, 1
        %p184 = scmp.lt.s32.totalorder %s18, 0
        %s185 = scalar_select %p184, %s18, 0
        %s186 = sadd.s32 %s185, %s183
        %s187 = smul.addr %s186, 8
        %s188 = scalar_lea.vmem %s2, %s187
      $region28: #{multi_head_attention.8} parent=15 // pred_fallthru
        _
    $region16: #{multi_head_attention.8} parent=5 // pred_fallthru
      _
    %p189 = scmp.le.s32.totalorder 1, %s9
    %p190 = scmp.lt.s32.totalorder %s9, 3
    %p191 = pnand %p189, %p190
    %p192 = pneg %p191
    // Predicated region
    $region29: #{multi_head_attention.8} parent=5 // pred_check
      _
    $region30: #{multi_head_attention.8} parent=5 // pred_check_branch
      %194 = sbr.rel (%p191) target = $region32
    $region31: #{multi_head_attention.8} parent=5 // pred_region
      %s195 = ssub.s32 %s9, 1
      %p196 = scmp.lt.s32.totalorder %s19, 1
      %s197 = scalar_select %p196, %s19, 1
      %p198 = scmp.lt.s32.totalorder %s20, 0
      %s199 = scalar_select %p198, %s20, 0
      %s200 = sadd.s32 %s199, %s197
      %s201 = smul.addr %s200, 8
      %s202 = scalar_lea.vmem %s0, %s201
      %p203 = pneg %p56
      %p204 = pneg %p53
      %p205 = scmp.lt.s32.totalorder %s19, 1
      %s206 = scalar_select %p205, %s19, 1
      %p207 = scmp.lt.s32.totalorder %s21, 0
      %s208 = scalar_select %p207, %s21, 0
      %s209 = sadd.s32 %s208, %s206
      %s210 = smul.addr %s209, 8
      %s211 = scalar_lea.vmem %s1, %s210
      %p212 = pneg %p84
      %p213 = pneg %p81
      %p214 = scmp.lt.s32.totalorder %s19, 1
      %s215 = scalar_select %p214, %s19, 1
      %p216 = scmp.lt.s32.totalorder %s21, 0
      %s217 = scalar_select %p216, %s21, 0
      %s218 = sadd.s32 %s217, %s215
      %s219 = smul.addr %s218, 8
      %s220 = scalar_lea.vmem %s2, %s219
      %p221 = pneg %p112
      %p222 = pneg %p109
      %p223 = pneg %p140
      %p224 = pneg %p137
      %p225 = scmp.lt.s32.totalorder %s19, 1
      %s226 = scalar_select %p225, %s19, 1
      %p227 = scmp.lt.s32.totalorder %s20, 0
      %s228 = scalar_select %p227, %s20, 0
      %s229 = sadd.s32 %s228, %s226
      %s230 = smul.addr %s229, 8
      %s231 = scalar_lea.vmem %s3, %s230
      %p232 = scmp.lt.s32.totalorder %s19, 1
      %s233 = scalar_select %p232, %s19, 1
      %p234 = scmp.lt.s32.totalorder %s20, 0
      %s235 = scalar_select %p234, %s20, 0
      %s236 = sadd.s32 %s235, %s233
      %s237 = smul.addr %s236, 8
      %s238 = scalar_lea.vmem %s0, %s237
      %p239 = scmp.lt.s32.totalorder %s19, 1
      %s240 = scalar_select %p239, %s19, 1
      %p241 = scmp.lt.s32.totalorder %s21, 0
      %s242 = scalar_select %p241, %s21, 0
      %s243 = sadd.s32 %s242, %s240
      %s244 = smul.addr %s243, 8
      %s245 = scalar_lea.vmem %s1, %s244
      %p246 = scmp.lt.s32.totalorder %s19, 1
      %s247 = scalar_select %p246, %s19, 1
      %p248 = scmp.lt.s32.totalorder %s21, 0
      %s249 = scalar_select %p248, %s21, 0
      %s250 = sadd.s32 %s249, %s247
      %s251 = smul.addr %s250, 8
      %s252 = scalar_lea.vmem %s2, %s251
      %p253 = scmp.lt.s32.totalorder %s19, 1
      %s254 = scalar_select %p253, %s19, 1
      %p255 = scmp.lt.s32.totalorder %s20, 0
      %s256 = scalar_select %p255, %s20, 0
      %s257 = sadd.s32 %s256, %s254
      %s258 = smul.addr %s257, 8
      %s259 = scalar_lea.vmem %s3, %s258
      %p260 = scmp.eq.s32.totalorder %s21, 0
      // Predicated region
      $region33: #{multi_head_attention.8} parent=31 // pred_check
        %p261 = pneg %p260
      $region34: #{multi_head_attention.8} parent=31 // pred_check_branch
        %263 = sbr.rel (%p261) target = $region36
      $region35: #{multi_head_attention.8} parent=31 // pred_region
        %vm264 = vcmask 31744
        %265 = vst.msk [vmem:[#allocation2] sm:$0xff] %vm264, -1e+30
        %266 = vst.msk [vmem:[#allocation3] sm:$0xff] %vm264, 0.0
        %vm267 = vcmask 64512
        %268 = vst.msk [vmem:[#allocation4] sm:$0xff] %vm267, 0.0
        %269 = vst.msk [vmem:[#allocation4 + $0x8] sm:$0xff] %vm267, 0.0
        %270 = vst.msk [vmem:[#allocation4 + $0x10] sm:$0xff] %vm267, 0.0
        %271 = vst.msk [vmem:[#allocation4 + $0x18] sm:$0xff] %vm267, 0.0
      $region36: #{multi_head_attention.8} parent=31 // pred_fallthru
        _
      %v272 = vld [vmem:[%s238] sm:$0xff]
      %v273 = vld [vmem:[%s245] sm:$0xff]
      %v274 = vld [vmem:[%s252] sm:$0xff]
      %vm275 = vcmask 64512
      %v277 = vsel %vm275, %v272, 0
      %v280 = vsel %vm275, %v273, 0
      %282 = vmatpush.xpose.msra.mxu0 0.0
      %283 = vmatpush.xpose.msra.mxu0 0.0
      %284 = vmatpush.xpose.msra.mxu0 0.0
      %285 = vmatpush.xpose.msra.mxu0 0.0
      %286 = vmatpush.xpose.msra.mxu0 0.0
      %287 = vmatpush.xpose.msra.mxu0 0.0
      %288 = vmatpush.xpose.msra.mxu0 0.0
      %289 = vmatpush.xpose.msra.mxu0 0.0
      %290 = vmatpush.xpose.msra.mxu0 0.0
      %291 = vmatpush.xpose.msra.mxu0 0.0
      %292 = vmatpush.xpose.msra.mxu0 0.0
      %293 = vmatpush.xpose.msra.mxu0 0.0
      %294 = vmatpush.xpose.msra.mxu0 0.0
      %295 = vmatpush.xpose.msra.mxu0 0.0
      %296 = vmatpush.xpose.msra.mxu0 0.0
      %297 = vmatpush.xpose.msra.mxu0 %v280
      %298 = vmatmul.f32.gmra.mxu0 %v277
      %v299 = vpop.f32.mrf.mxu0
      %v300 = vadd.f32 0.0, %v299
      %301 = vdwg.mxu0
      %v302 = vld [vmem:[#allocation2] sm:$0xff]
      %v303 = vsel %vm275, %v300, -inf
      %304 = vmax.xlane.f32.xlu0 %v303
      %v305 = vpop.xlane.xlu0 %304
      %v306 = vmax.f32 %v302, %v305
      %v307 = vsub.f32 %v302, %v306
      %v308 = vmul.f32 %v307, 1.442695
      %v309 = vpow.pop %v308
      %311 = vset.pattern.permute.xlu0 0
      %312 = vperm.xlu0 %311, %v306
      %v313 = vpop.permute.xlu0 %312
      %v315 = vsub.f32 %v300, %v313
      %v316 = vmul.f32 %v315, 1.442695
      %v317 = vpow.pop %v316
      %v318 = vld [vmem:[#allocation3] sm:$0xff]
      %v319 = vmul.f32 %v309, %v318
      %v320 = vsel %vm275, %v317, 0.0
      %321 = vadd.xlane.f32.xlu0 %v320
      %v322 = vpop.xlane.xlu0 %321
      %v323 = vadd.f32 %v319, %v322
      %vm324 = vcmask 7168
      %325 = vst.msk [vmem:[#allocation3] sm:$0xff] %vm324, %v323
      %v326 = vld [vmem:[#allocation4] sm:$0xff]
      %328 = vset.pattern.permute.xlu0 0
      %329 = vperm.xlu0 %328, %v309
      %v330 = vpop.permute.xlu0 %329
      %v332 = vmul.f32 %v330, %v326
      %v334 = vsel %vm275, %v317, 0
      %336 = vmatpush.msra.mxu0 0.0
      %337 = vmatpush.msra.mxu0 0.0
      %338 = vmatpush.msra.mxu0 0.0
      %339 = vmatpush.msra.mxu0 0.0
      %340 = vmatpush.msra.mxu0 0.0
      %341 = vmatpush.msra.mxu0 0.0
      %342 = vmatpush.msra.mxu0 0.0
      %343 = vmatpush.msra.mxu0 0.0
      %344 = vmatpush.msra.mxu0 0.0
      %345 = vmatpush.msra.mxu0 0.0
      %346 = vmatpush.msra.mxu0 0.0
      %347 = vmatpush.msra.mxu0 0.0
      %348 = vmatpush.msra.mxu0 0.0
      %349 = vmatpush.msra.mxu0 0.0
      %350 = vmatpush.msra.mxu0 0.0
      %351 = vmatpush.msra.mxu0 %v274
      %352 = vmatmul.f32.gmra.mxu0 %v334
      %v353 = vpop.f32.mrf.mxu0
      %v354 = vadd.f32 0.0, %v353
      %355 = vdwg.mxu0
      %v356 = vadd.f32 %v332, %v354
      %357 = vst.msk [vmem:[#allocation4] sm:$0xff] %vm275, %v356
      %358 = vst.msk [vmem:[#allocation2] sm:$0xff] %vm324, %v306
      %v359 = vld [vmem:[%s238] sm:$0xff]
      %v360 = vld [vmem:[%s245] sm:$0xff]
      %v361 = vld [vmem:[%s252] sm:$0xff]
      %363 = vrot.lane.b32.xlu0 %v359, 120
      %v364 = vpop.permute.xlu0 %363
      %366 = vrot.lane.b32.xlu0 %v360, 120
      %v367 = vpop.permute.xlu0 %366
      %v368 = vsel %vm275, %v364, 0
      %v370 = vsel %vm275, %v367, 0
      %372 = vmatpush.xpose.msra.mxu0 0.0
      %373 = vmatpush.xpose.msra.mxu0 0.0
      %374 = vmatpush.xpose.msra.mxu0 0.0
      %375 = vmatpush.xpose.msra.mxu0 0.0
      %376 = vmatpush.xpose.msra.mxu0 0.0
      %377 = vmatpush.xpose.msra.mxu0 0.0
      %378 = vmatpush.xpose.msra.mxu0 0.0
      %379 = vmatpush.xpose.msra.mxu0 0.0
      %380 = vmatpush.xpose.msra.mxu0 0.0
      %381 = vmatpush.xpose.msra.mxu0 0.0
      %382 = vmatpush.xpose.msra.mxu0 0.0
      %383 = vmatpush.xpose.msra.mxu0 0.0
      %384 = vmatpush.xpose.msra.mxu0 0.0
      %385 = vmatpush.xpose.msra.mxu0 0.0
      %386 = vmatpush.xpose.msra.mxu0 0.0
      %387 = vmatpush.xpose.msra.mxu0 %v370
      %388 = vmatmul.f32.gmra.mxu0 %v368
      %v389 = vpop.f32.mrf.mxu0
      %v390 = vadd.f32 0.0, %v389
      %391 = vdwg.mxu0
      %v392 = vld [vmem:[#allocation2] sm:$0xff]
      %v393 = vsel %vm275, %v390, -inf
      %394 = vmax.xlane.f32.xlu0 %v393
      %v395 = vpop.xlane.xlu0 %394
      %v396 = vmax.f32 %v392, %v395
      %v397 = vsub.f32 %v392, %v396
      %v398 = vmul.f32 %v397, 1.442695
      %v399 = vpow.pop %v398
      %401 = vset.pattern.permute.xlu0 1
      %402 = vperm.xlu0 %401, %v396
      %v403 = vpop.permute.xlu0 %402
      %v405 = vsub.f32 %v390, %v403
      %v406 = vmul.f32 %v405, 1.442695
      %v407 = vpow.pop %v406
      %v408 = vld [vmem:[#allocation3] sm:$0xff]
      %v409 = vmul.f32 %v399, %v408
      %v410 = vsel %vm275, %v407, 0.0
      %411 = vadd.xlane.f32.xlu0 %v410
      %v412 = vpop.xlane.xlu0 %411
      %v413 = vadd.f32 %v409, %v412
      %vm414 = vcmask 15368
      %415 = vst.msk [vmem:[#allocation3] sm:$0xff] %vm414, %v413
      %s416 = scalar_lea.vmem [#allocation4], 8
      %v417 = vld [vmem:[%s416] sm:$0xff]
      %419 = vset.pattern.permute.xlu0 1
      %420 = vperm.xlu0 %419, %v399
      %v421 = vpop.permute.xlu0 %420
      %v423 = vmul.f32 %v421, %v417
      %425 = vrot.lane.b32.xlu0 %v361, 120
      %v426 = vpop.permute.xlu0 %425
      %v429 = vsel %vm275, %v407, 0
      %431 = vmatpush.msra.mxu0 0.0
      %432 = vmatpush.msra.mxu0 0.0
      %433 = vmatpush.msra.mxu0 0.0
      %434 = vmatpush.msra.mxu0 0.0
      %435 = vmatpush.msra.mxu0 0.0
      %436 = vmatpush.msra.mxu0 0.0
      %437 = vmatpush.msra.mxu0 0.0
      %438 = vmatpush.msra.mxu0 0.0
      %439 = vmatpush.msra.mxu0 0.0
      %440 = vmatpush.msra.mxu0 0.0
      %441 = vmatpush.msra.mxu0 0.0
      %442 = vmatpush.msra.mxu0 0.0
      %443 = vmatpush.msra.mxu0 0.0
      %444 = vmatpush.msra.mxu0 0.0
      %445 = vmatpush.msra.mxu0 0.0
      %446 = vmatpush.msra.mxu0 %v426
      %447 = vmatmul.f32.gmra.mxu0 %v429
      %v448 = vpop.f32.mrf.mxu0
      %v449 = vadd.f32 0.0, %v448
      %450 = vdwg.mxu0
      %v451 = vadd.f32 %v423, %v449
      %452 = vst.msk [vmem:[%s416] sm:$0xff] %vm275, %v451
      %453 = vst.msk [vmem:[#allocation2] sm:$0xff] %vm414, %v396
      %v454 = vld [vmem:[%s238] sm:$0xff]
      %v455 = vld [vmem:[%s245] sm:$0xff]
      %v456 = vld [vmem:[%s252] sm:$0xff]
      %458 = vrot.lane.b32.xlu0 %v454, 112
      %v459 = vpop.permute.xlu0 %458
      %461 = vrot.lane.b32.xlu0 %v455, 112
      %v462 = vpop.permute.xlu0 %461
      %v463 = vsel %vm275, %v459, 0
      %v465 = vsel %vm275, %v462, 0
      %467 = vmatpush.xpose.msra.mxu0 0.0
      %468 = vmatpush.xpose.msra.mxu0 0.0
      %469 = vmatpush.xpose.msra.mxu0 0.0
      %470 = vmatpush.xpose.msra.mxu0 0.0
      %471 = vmatpush.xpose.msra.mxu0 0.0
      %472 = vmatpush.xpose.msra.mxu0 0.0
      %473 = vmatpush.xpose.msra.mxu0 0.0
      %474 = vmatpush.xpose.msra.mxu0 0.0
      %475 = vmatpush.xpose.msra.mxu0 0.0
      %476 = vmatpush.xpose.msra.mxu0 0.0
      %477 = vmatpush.xpose.msra.mxu0 0.0
      %478 = vmatpush.xpose.msra.mxu0 0.0
      %479 = vmatpush.xpose.msra.mxu0 0.0
      %480 = vmatpush.xpose.msra.mxu0 0.0
      %481 = vmatpush.xpose.msra.mxu0 0.0
      %482 = vmatpush.xpose.msra.mxu0 %v465
      %483 = vmatmul.f32.gmra.mxu0 %v463
      %v484 = vpop.f32.mrf.mxu0
      %v485 = vadd.f32 0.0, %v484
      %486 = vdwg.mxu0
      %v487 = vld [vmem:[#allocation2] sm:$0xff]
      %v488 = vsel %vm275, %v485, -inf
      %489 = vmax.xlane.f32.xlu0 %v488
      %v490 = vpop.xlane.xlu0 %489
      %v491 = vmax.f32 %v487, %v490
      %v492 = vsub.f32 %v487, %v491
      %v493 = vmul.f32 %v492, 1.442695
      %v494 = vpow.pop %v493
      %496 = vset.pattern.permute.xlu0 2
      %497 = vperm.xlu0 %496, %v491
      %v498 = vpop.permute.xlu0 %497
      %v500 = vsub.f32 %v485, %v498
      %v501 = vmul.f32 %v500, 1.442695
      %v502 = vpow.pop %v501
      %v503 = vld [vmem:[#allocation3] sm:$0xff]
      %v504 = vmul.f32 %v494, %v503
      %v505 = vsel %vm275, %v502, 0.0
      %506 = vadd.xlane.f32.xlu0 %v505
      %v507 = vpop.xlane.xlu0 %506
      %v508 = vadd.f32 %v504, %v507
      %vm509 = vcmask 23568
      %510 = vst.msk [vmem:[#allocation3] sm:$0xff] %vm509, %v508
      %s511 = scalar_lea.vmem [#allocation4], 16
      %v512 = vld [vmem:[%s511] sm:$0xff]
      %514 = vset.pattern.permute.xlu0 2
      %515 = vperm.xlu0 %514, %v494
      %v516 = vpop.permute.xlu0 %515
      %v518 = vmul.f32 %v516, %v512
      %520 = vrot.lane.b32.xlu0 %v456, 112
      %v521 = vpop.permute.xlu0 %520
      %v524 = vsel %vm275, %v502, 0
      %526 = vmatpush.msra.mxu0 0.0
      %527 = vmatpush.msra.mxu0 0.0
      %528 = vmatpush.msra.mxu0 0.0
      %529 = vmatpush.msra.mxu0 0.0
      %530 = vmatpush.msra.mxu0 0.0
      %531 = vmatpush.msra.mxu0 0.0
      %532 = vmatpush.msra.mxu0 0.0
      %533 = vmatpush.msra.mxu0 0.0
      %534 = vmatpush.msra.mxu0 0.0
      %535 = vmatpush.msra.mxu0 0.0
      %536 = vmatpush.msra.mxu0 0.0
      %537 = vmatpush.msra.mxu0 0.0
      %538 = vmatpush.msra.mxu0 0.0
      %539 = vmatpush.msra.mxu0 0.0
      %540 = vmatpush.msra.mxu0 0.0
      %541 = vmatpush.msra.mxu0 %v521
      %542 = vmatmul.f32.gmra.mxu0 %v524
      %v543 = vpop.f32.mrf.mxu0
      %v544 = vadd.f32 0.0, %v543
      %545 = vdwg.mxu0
      %v546 = vadd.f32 %v518, %v544
      %547 = vst.msk [vmem:[%s511] sm:$0xff] %vm275, %v546
      %548 = vst.msk [vmem:[#allocation2] sm:$0xff] %vm509, %v491
      %v549 = vld [vmem:[%s238] sm:$0xff]
      %v550 = vld [vmem:[%s245] sm:$0xff]
      %v551 = vld [vmem:[%s252] sm:$0xff]
      %553 = vrot.lane.b32.xlu0 %v549, 104
      %v554 = vpop.permute.xlu0 %553
      %556 = vrot.lane.b32.xlu0 %v550, 104
      %v557 = vpop.permute.xlu0 %556
      %v558 = vsel %vm275, %v554, 0
      %v560 = vsel %vm275, %v557, 0
      %562 = vmatpush.xpose.msra.mxu0 0.0
      %563 = vmatpush.xpose.msra.mxu0 0.0
      %564 = vmatpush.xpose.msra.mxu0 0.0
      %565 = vmatpush.xpose.msra.mxu0 0.0
      %566 = vmatpush.xpose.msra.mxu0 0.0
      %567 = vmatpush.xpose.msra.mxu0 0.0
      %568 = vmatpush.xpose.msra.mxu0 0.0
      %569 = vmatpush.xpose.msra.mxu0 0.0
      %570 = vmatpush.xpose.msra.mxu0 0.0
      %571 = vmatpush.xpose.msra.mxu0 0.0
      %572 = vmatpush.xpose.msra.mxu0 0.0
      %573 = vmatpush.xpose.msra.mxu0 0.0
      %574 = vmatpush.xpose.msra.mxu0 0.0
      %575 = vmatpush.xpose.msra.mxu0 0.0
      %576 = vmatpush.xpose.msra.mxu0 0.0
      %577 = vmatpush.xpose.msra.mxu0 %v560
      %578 = vmatmul.f32.gmra.mxu0 %v558
      %v579 = vpop.f32.mrf.mxu0
      %v580 = vadd.f32 0.0, %v579
      %581 = vdwg.mxu0
      %v582 = vld [vmem:[#allocation2] sm:$0xff]
      %v583 = vsel %vm275, %v580, -inf
      %584 = vmax.xlane.f32.xlu0 %v583
      %v585 = vpop.xlane.xlu0 %584
      %v586 = vmax.f32 %v582, %v585
      %v587 = vsub.f32 %v582, %v586
      %v588 = vmul.f32 %v587, 1.442695
      %v589 = vpow.pop %v588
      %591 = vset.pattern.permute.xlu0 3
      %592 = vperm.xlu0 %591, %v586
      %v593 = vpop.permute.xlu0 %592
      %v595 = vsub.f32 %v580, %v593
      %v596 = vmul.f32 %v595, 1.442695
      %v597 = vpow.pop %v596
      %v598 = vld [vmem:[#allocation3] sm:$0xff]
      %v599 = vmul.f32 %v589, %v598
      %v600 = vsel %vm275, %v597, 0.0
      %601 = vadd.xlane.f32.xlu0 %v600
      %v602 = vpop.xlane.xlu0 %601
      %v603 = vadd.f32 %v599, %v602
      %vm604 = vcmask 31768
      %605 = vst.msk [vmem:[#allocation3] sm:$0xff] %vm604, %v603
      %s606 = scalar_lea.vmem [#allocation4], 24
      %v607 = vld [vmem:[%s606] sm:$0xff]
      %609 = vset.pattern.permute.xlu0 3
      %610 = vperm.xlu0 %609, %v589
      %v611 = vpop.permute.xlu0 %610
      %v613 = vmul.f32 %v611, %v607
      %615 = vrot.lane.b32.xlu0 %v551, 104
      %v616 = vpop.permute.xlu0 %615
      %v619 = vsel %vm275, %v597, 0
      %621 = vmatpush.msra.mxu0 0.0
      %622 = vmatpush.msra.mxu0 0.0
      %623 = vmatpush.msra.mxu0 0.0
      %624 = vmatpush.msra.mxu0 0.0
      %625 = vmatpush.msra.mxu0 0.0
      %626 = vmatpush.msra.mxu0 0.0
      %627 = vmatpush.msra.mxu0 0.0
      %628 = vmatpush.msra.mxu0 0.0
      %629 = vmatpush.msra.mxu0 0.0
      %630 = vmatpush.msra.mxu0 0.0
      %631 = vmatpush.msra.mxu0 0.0
      %632 = vmatpush.msra.mxu0 0.0
      %633 = vmatpush.msra.mxu0 0.0
      %634 = vmatpush.msra.mxu0 0.0
      %635 = vmatpush.msra.mxu0 0.0
      %636 = vmatpush.msra.mxu0 %v616
      %637 = vmatmul.f32.gmra.mxu0 %v619
      %v638 = vpop.f32.mrf.mxu0
      %v639 = vadd.f32 0.0, %v638
      %640 = vdwg.mxu0
      %v641 = vadd.f32 %v613, %v639
      %642 = vst.msk [vmem:[%s606] sm:$0xff] %vm275, %v641
      %643 = vst.msk [vmem:[#allocation2] sm:$0xff] %vm604, %v586
      // Predicated region
      $region37: #{multi_head_attention.8} parent=31 // pred_check
        %p644 = pneg %p260
      $region38: #{multi_head_attention.8} parent=31 // pred_check_branch
        %646 = sbr.rel (%p644) target = $region40
      $region39: #{multi_head_attention.8} parent=31 // pred_region
        %v647 = vld [vmem:[#allocation3] sm:$0xff]
        %v648 = vrcp.pop %v647
        %v649 = vmul.f32 %v647, %v648
        %v650 = vsub.f32 1.0, %v649
        %v651 = vmul.f32 %v648, %v650
        %v652 = vadd.f32 %v648, %v651
        %vm653 = vweird.f32 %v647
        %vm654 = vweird.f32 %v648
        %vm655 = vmor %vm653, %vm654
        %v656 = vsel %vm655, %v648, %v652
        %v657 = vand.u32 2147483647, %v647
        %vm658 = vcmp.eq.f32.partialorder %v657, 8.507059e+37
        %v659 = vand.u32 %v647, 2147483648
        %v660 = vor.u32 1.1754944e-38, %v659
        %v661 = vsel %vm658, %v660, %v656
        %v662 = vmul.f32 1.0, %v661
        %v663 = vld [vmem:[#allocation4] sm:$0xff]
        %665 = vset.pattern.permute.xlu0 0
        %666 = vperm.xlu0 %665, %v662
        %v667 = vpop.permute.xlu0 %666
        %v669 = vmul.f32 %v663, %v667
        %v670 = vld [vmem:[%s416] sm:$0xff]
        %671 = vset.pattern.permute.xlu0 1
        %672 = vperm.xlu0 %671, %v662
        %v673 = vpop.permute.xlu0 %672
        %v675 = vmul.f32 %v670, %v673
        %v676 = vld [vmem:[%s511] sm:$0xff]
        %677 = vset.pattern.permute.xlu0 2
        %678 = vperm.xlu0 %677, %v662
        %v679 = vpop.permute.xlu0 %678
        %v681 = vmul.f32 %v676, %v679
        %v682 = vld [vmem:[%s606] sm:$0xff]
        %683 = vset.pattern.permute.xlu0 3
        %684 = vperm.xlu0 %683, %v662
        %v685 = vpop.permute.xlu0 %684
        %v687 = vmul.f32 %v682, %v685
        %689 = vrot.lane.b32.xlu0 %v675, 8
        %v690 = vpop.permute.xlu0 %689
        %693 = vrot.lane.b32.xlu0 %v681, 16
        %v694 = vpop.permute.xlu0 %693
        %697 = vrot.lane.b32.xlu0 %v687, 24
        %v698 = vpop.permute.xlu0 %697
        %v700 = vsel %vm275, %v669, %v690
        %vm701 = vcmask 130048
        %v702 = vsel %vm701, %v700, %v694
        %vm703 = vcmask 195584
        %v704 = vsel %vm703, %v702, %v698
        %vm705 = vcmask 261120
        %706 = vst.msk [vmem:[%s259] sm:$0xff] %vm705, %v704
      $region40: #{multi_head_attention.8} parent=31 // pred_fallthru
        _
      %p707 = scmp.lt.s32.totalorder %s19, 1
      %s708 = scalar_select %p707, %s19, 1
      %p709 = scmp.lt.s32.totalorder %s20, 0
      %s710 = scalar_select %p709, %s20, 0
      %s711 = sadd.s32 %s710, %s708
      %s712 = smul.addr %s711, 8
      %s713 = scalar_lea.vmem %s3, %s712
      // Predicated region
      $region41: #{multi_head_attention.8} parent=31 // pred_check
        %p714 = pneg %p137
      $region42: #{multi_head_attention.8} parent=31 // pred_check_branch
        %716 = sbr.rel (%p714) target = $region44
      $region43: #{multi_head_attention.8} parent=31 // pred_region
        _
      $region44: #{multi_head_attention.8} parent=31 // pred_fallthru
        _
    $region32: #{multi_head_attention.8} parent=5 // pred_fallthru
      _
    %p717 = scmp.le.s32.totalorder 2, %s9
    // Predicated region
    $region45: #{multi_head_attention.8} parent=5 // pred_check
      %p718 = pneg %p717
    $region46: #{multi_head_attention.8} parent=5 // pred_check_branch
      %720 = sbr.rel (%p718) target = $region48
    $region47: #{multi_head_attention.8} parent=5 // pred_region
      %s721 = ssub.s32 %s9, 2
      // Predicated region
      $region49: #{multi_head_attention.8} parent=47 // pred_check
        %p722 = pneg %p143
      $region50: #{multi_head_attention.8} parent=47 // pred_check_branch
        %724 = sbr.rel (%p722) target = $region52
      $region51: #{multi_head_attention.8} parent=47 // pred_region
        %p725 = scmp.lt.s32.totalorder %s22, 1
        %s726 = scalar_select %p725, %s22, 1
        %p727 = scmp.lt.s32.totalorder %s23, 0
        %s728 = scalar_select %p727, %s23, 0
        %s729 = sadd.s32 %s728, %s726
        %s730 = smul.addr %s729, 8
        %s731 = scalar_lea.vmem %s3, %s730
      $region52: #{multi_head_attention.8} parent=47 // pred_fallthru
        _
    $region48: #{multi_head_attention.8} parent=5 // pred_fallthru
      _
  $region6: #{multi_head_attention.8} parent=0 // loop_footer
    %s13 = sadd.s32 1, %s9
  $region7: #{multi_head_attention.8} parent=0 // loop_footer_branch
    %8 = sbr.rel target = $region3
  $region8: #{multi_head_attention.8} parent=0 // loop_exit
    _

</llo_original>
